<compile_context>
chip_gen: v6e
topology: v6e:2x2x1
jax: 0.10.0
libtpu: 0.0.40
codegen_flags: <defaults>
</compile_context>

<pallas_src>
import numpy as np

import jax
import jax.numpy as jnp
from jax.experimental import pallas as pl
from jax.experimental.pallas import tpu as pltpu  # noqa: F401  (TPU backend assumed)


# ----------------------------------------------------------------------------
# Static problem sizes (kept small & consistent with the module)
# ----------------------------------------------------------------------------
B = 2                    # batch
C_IN = 4                 # input channels
H = W = 16               # input spatial size
C1 = 8                   # conv1 output channels
C2 = 16                  # conv2 output channels
OH1 = OW1 = H // 2       # 8  (after conv1, stride 2)
OH2 = OW2 = OH1 // 2     # 4  (after conv2, stride 2)
P2 = OH2 * OW2           # 16 spatial positions after conv2
PB = P2 * B              # 32 conv2 output rows (ordered p-major, batch inner)
NP1 = B * OH1 * OW1      # 128 conv1 output rows (ordered b, oh, ow)
FEAT = P2 * C2           # 256 flattened encoder features per branch
LATENT = 32
N_CLASSES = 3
CLS_PAD = 128            # classifier logits padded to a full lane group
DEC = C_IN * H * W       # 1024 decoder outputs per branch
HEAD = CLS_PAD + DEC     # 1152 per branch
HEAD_BOTH = 2 * HEAD     # 2304 = 18 * 128 -> lane-dense output slab
LAT_SLAB = 256           # [mu_f|mu_o | lv_f|lv_o | z_f|z_o | pad64]


# ----------------------------------------------------------------------------
# Pallas kernel: both VAE-classifier branches, fully fused, single invocation
# ----------------------------------------------------------------------------
def _fused_vae_kernel(p1_ref, eps_ref, gcat_ref,
                      w1_ref, b1_ref, w2_ref, b2_ref,
                      wml_ref, bml_ref, wh_ref, bh_ref,
                      lat_ref, head_ref):
    f32 = jnp.float32
    bf16 = jnp.bfloat16

    # ---- conv1 (both branches, block-diagonal weights): one MXU push --------
    h1 = jnp.dot(p1_ref[...], w1_ref[...], preferred_element_type=f32) + b1_ref[...]
    h1 = jnp.maximum(h1, 0.0).astype(bf16)                  # (128, 16) [f | o]

    # ---- conv2 patch gather: ALL 9 taps in ONE selector matmul --------------
    big = jnp.dot(gcat_ref[...], h1, preferred_element_type=f32)   # (288, 16)
    big = big.astype(bf16)                                   # exact (gathered bf16)

    # ---- 9 per-tap products, summed as a balanced tree (no serial chain) ----
    parts = [jnp.dot(big[t * PB:(t + 1) * PB, :], w2_ref[t],
                     preferred_element_type=f32) for t in range(9)]
    while len(parts) > 1:
        nxt = [parts[i] + parts[i + 1] for i in range(0, len(parts) - 1, 2)]
        if len(parts) % 2:
            nxt.append(parts[-1])
        parts = nxt
    h2 = jnp.maximum(parts[0] + b2_ref[...], 0.0)            # (32, 32), rows (p, b)

    # ---- flatten (p,b)-rows into per-batch lane-dense features, in registers
    pieces = ([h2[p * B:(p + 1) * B, 0:C2] for p in range(P2)] +        # feat_f
              [h2[p * B:(p + 1) * B, C2:2 * C2] for p in range(P2)])    # feat_o
    feat = jnp.concatenate(pieces, axis=1)                   # (B, 512) [f | o]

    # ---- fc_mu / fc_logvar (both branches, one f32 matmul) + reparameterize -
    ml = jnp.dot(feat, wml_ref[...], preferred_element_type=f32) + bml_ref[...]
    mu = ml[:, 0:2 * LATENT]                                 # [mu_f | mu_o]
    lv = ml[:, 2 * LATENT:4 * LATENT]                        # [lv_f | lv_o]
    z = mu + eps_ref[...] * jnp.exp(0.5 * lv)                # (B, 64)

    # single full-width lane-dense store
    lat_ref[...] = jnp.concatenate(
        [mu, lv, z, jnp.zeros((B, LAT_SLAB - 6 * LATENT), f32)], axis=1)

    # ---- classifier + decoder (both branches): one lane-dense matmul --------
    head = jnp.dot(z.astype(bf16), wh_ref[...], preferred_element_type=f32)
    head = head + bh_ref[...]                                # (B, 2304)
    lane = jax.lax.broadcasted_iota(jnp.int32, (B, HEAD_BOTH), 1)
    # cols [0,256): raw logits (f then o, each padded to 128); rest: sigmoid(dec)
    head_ref[...] = jnp.where(lane < 2 * CLS_PAD, head, jax.nn.sigmoid(head))


_fused_call = pl.pallas_call(
    _fused_vae_kernel,
    out_shape=(jax.ShapeDtypeStruct((B, LAT_SLAB), jnp.float32),
               jax.ShapeDtypeStruct((B, HEAD_BOTH), jnp.float32)),
)


# ----------------------------------------------------------------------------
# Wrapper-side helpers (one-time packing + cheap input prep)
# ----------------------------------------------------------------------------
def _im2col_3x3_s2(x_nhwc):
    """3x3 / stride-2 / pad-1 patches -> (B*OH*OW, 9*C), rows ordered (b, oh, ow).
    Column order: (ki, kj) outer, channel inner (matches the synthetic weights)."""
    b, h, w, c = x_nhwc.shape
    oh, ow = h // 2, w // 2
    xp = jnp.pad(x_nhwc, ((0, 0), (1, 1), (1, 1), (0, 0)))
    cols = [xp[:, ki:ki + 2 * oh:2, kj:kj + 2 * ow:2, :]
            for ki in range(3) for kj in range(3)]
    return jnp.concatenate(cols, axis=-1).reshape(b * oh * ow, 9 * c)


def _build_gcat():
    """Constant 0/1 selector Gcat (9*P2*B, B*OH1*OW1): row t*32 + p*B + b picks,
    for conv2 tap t = ki*3+kj, the conv1 activation feeding output position p of
    batch b (zero padding = all-zero rows)."""
    g = np.zeros((9 * PB, NP1), np.float32)
    for ki in range(3):
        for kj in range(3):
            t = ki * 3 + kj
            for oh in range(OH2):
                ih = 2 * oh + ki - 1
                if not 0 <= ih < OH1:
                    continue
                for ow in range(OW2):
                    iw = 2 * ow + kj - 1
                    if not 0 <= iw < OW1:
                        continue
                    p = oh * OW2 + ow
                    for bb in range(B):
                        g[t * PB + p * B + bb, bb * OH1 * OW1 + ih * OW1 + iw] = 1.0
    return g


def init_branch_params(key):
    """Deterministic synthetic weights; conv weights in im2col layout."""
    ks = jax.random.split(key, 6)

    def winit(k, shape, fan_in):
        return jax.random.normal(k, shape, jnp.float32) / jnp.sqrt(fan_in)

    return {
        "conv1_w": winit(ks[0], (9 * C_IN, C1), 9 * C_IN),    # (36, 8)
        "conv1_b": jnp.zeros((C1,), jnp.float32),
        "conv2_w": winit(ks[1], (9 * C1, C2), 9 * C1),        # (72, 16)
        "conv2_b": jnp.zeros((C2,), jnp.float32),
        "fc_mu_w": winit(ks[2], (FEAT, LATENT), FEAT),
        "fc_mu_b": jnp.zeros((LATENT,), jnp.float32),
        "fc_logvar_w": winit(ks[3], (FEAT, LATENT), FEAT),
        "fc_logvar_b": jnp.zeros((LATENT,), jnp.float32),
        "cls_w": winit(ks[4], (LATENT, N_CLASSES), LATENT),
        "cls_b": jnp.zeros((N_CLASSES,), jnp.float32),
        "dec_w": winit(ks[5], (LATENT, DEC), LATENT),
        "dec_b": jnp.zeros((DEC,), jnp.float32),
    }


def pack_params(pf, po):
    """One-time (outside jit) fusion of both branches' weights into the
    block-diagonal / lane-dense layouts the kernel consumes."""
    def n(x):
        return np.asarray(x, np.float32)

    # conv1: block-diag (72, 16)
    w1 = np.zeros((2 * 9 * C_IN, 2 * C1), np.float32)
    w1[:9 * C_IN, :C1] = n(pf["conv1_w"])
    w1[9 * C_IN:, C1:] = n(po["conv1_w"])
    b1 = np.concatenate([n(pf["conv1_b"]), n(po["conv1_b"])]).reshape(1, 2 * C1)

    # conv2: per-tap block-diag (9, 16, 32)
    w2 = np.zeros((9, 2 * C1, 2 * C2), np.float32)
    w2[:, :C1, :C2] = n(pf["conv2_w"]).reshape(9, C1, C2)
    w2[:, C1:, C2:] = n(po["conv2_w"]).reshape(9, C1, C2)
    b2 = np.concatenate([n(pf["conv2_b"]), n(po["conv2_b"])]).reshape(1, 2 * C2)

    # fc_mu / fc_logvar: block-diag (512, 128), cols [mu_f|mu_o|lv_f|lv_o]
    wml = np.zeros((2 * FEAT, 4 * LATENT), np.float32)
    wml[:FEAT, 0:LATENT] = n(pf["fc_mu_w"])
    wml[FEAT:, LATENT:2 * LATENT] = n(po["fc_mu_w"])
    wml[:FEAT, 2 * LATENT:3 * LATENT] = n(pf["fc_logvar_w"])
    wml[FEAT:, 3 * LATENT:4 * LATENT] = n(po["fc_logvar_w"])
    bml = np.concatenate([n(pf["fc_mu_b"]), n(po["fc_mu_b"]),
                          n(pf["fc_logvar_b"]), n(po["fc_logvar_b"])]
                         ).reshape(1, 4 * LATENT)

    # classifier + decoder: block-diag (64, 2304),
    # cols [cls_f pad128 | cls_o pad128 | dec_f 1024 | dec_o 1024]
    wh = np.zeros((2 * LATENT, HEAD_BOTH), np.float32)
    wh[:LATENT, 0:N_CLASSES] = n(pf["cls_w"])
    wh[LATENT:, CLS_PAD:CLS_PAD + N_CLASSES] = n(po["cls_w"])
    wh[:LATENT, 2 * CLS_PAD:2 * CLS_PAD + DEC] = n(pf["dec_w"])
    wh[LATENT:, 2 * CLS_PAD + DEC:] = n(po["dec_w"])
    bh = np.zeros((1, HEAD_BOTH), np.float32)
    bh[0, 0:N_CLASSES] = n(pf["cls_b"])
    bh[0, CLS_PAD:CLS_PAD + N_CLASSES] = n(po["cls_b"])
    bh[0, 2 * CLS_PAD:2 * CLS_PAD + DEC] = n(pf["dec_b"])
    bh[0, 2 * CLS_PAD + DEC:] = n(po["dec_b"])

    gcat = _build_gcat()   # 0/1 values: exact in bf16

    return (jnp.asarray(gcat, jnp.bfloat16),
            jnp.asarray(w1, jnp.bfloat16), jnp.asarray(b1, jnp.float32),
            jnp.asarray(w2, jnp.bfloat16), jnp.asarray(b2, jnp.float32),
            jnp.asarray(wml, jnp.float32), jnp.asarray(bml, jnp.float32),
            jnp.asarray(wh, jnp.bfloat16), jnp.asarray(bh, jnp.float32))


# ----------------------------------------------------------------------------
# Forward pass mirroring mcvae_classifier_retina.forward
# ----------------------------------------------------------------------------
@jax.jit
def mcvae_classifier_retina_forward(x_oct, x_fundus, eps_fundus, eps_oct, packed):
    gcat, w1, b1, w2, b2, wml, bml, wh, bh = packed

    xf = jnp.transpose(x_fundus, (0, 2, 3, 1))        # NCHW -> NHWC
    xo = jnp.transpose(x_oct, (0, 2, 3, 1))
    p1both = jnp.concatenate([_im2col_3x3_s2(xf), _im2col_3x3_s2(xo)],
                             axis=1).astype(jnp.bfloat16)      # (128, 72)
    eps_both = jnp.concatenate([eps_fundus, eps_oct], axis=1)  # (B, 64)

    lat, head = _fused_call(p1both, eps_both, gcat,
                            w1, b1, w2, b2, wml, bml, wh, bh)

    mu_f = lat[:, 0:LATENT]
    mu_o = lat[:, LATENT:2 * LATENT]
    lv_f = lat[:, 2 * LATENT:3 * LATENT]
    lv_o = lat[:, 3 * LATENT:4 * LATENT]
    z_f = lat[:, 4 * LATENT:5 * LATENT]
    z_o = lat[:, 5 * LATENT:6 * LATENT]

    y_f = head[:, 0:N_CLASSES]
    y_o = head[:, CLS_PAD:CLS_PAD + N_CLASSES]
    xr_f = head[:, 2 * CLS_PAD:2 * CLS_PAD + DEC].reshape(x_fundus.shape)
    xr_o = head[:, 2 * CLS_PAD + DEC:2 * CLS_PAD + 2 * DEC].reshape(x_oct.shape)

    return (y_f, y_o, xr_f, xr_o, z_f, mu_f, lv_f, z_o, mu_o, lv_o)


# ----------------------------------------------------------------------------
# Pure-JAX reference (for a numerical sanity check)
# ----------------------------------------------------------------------------
def _reference_branch(x_nchw, p, eps):
    hp = jax.lax.Precision.HIGHEST
    x = jnp.transpose(x_nchw, (0, 2, 3, 1))
    b = x.shape[0]
    h1 = jnp.maximum(
        jnp.dot(_im2col_3x3_s2(x), p["conv1_w"], precision=hp) + p["conv1_b"], 0.0)
    h1 = h1.reshape(b, OH1, OW1, C1)
    h2 = jnp.maximum(
        jnp.dot(_im2col_3x3_s2(h1), p["conv2_w"], precision=hp) + p["conv2_b"], 0.0)
    feat = h2.reshape(b, FEAT)
    mu = jnp.dot(feat, p["fc_mu_w"], precision=hp) + p["fc_mu_b"]
    logvar = jnp.dot(feat, p["fc_logvar_w"], precision=hp) + p["fc_logvar_b"]
    z = mu + eps * jnp.exp(0.5 * logvar)
    y = jnp.dot(z, p["cls_w"], precision=hp) + p["cls_b"]
    x_recon = jax.nn.sigmoid(
        jnp.dot(z, p["dec_w"], precision=hp) + p["dec_b"]).reshape(x_nchw.shape)
    return y, x_recon, z, mu, logvar


def reference_forward(x_oct, x_fundus, params_fundus, params_oct,
                      eps_fundus, eps_oct):
    y_f, xr_f, z_f, mu_f, lv_f = _reference_branch(x_fundus, params_fundus, eps_fundus)
    y_o, xr_o, z_o, mu_o, lv_o = _reference_branch(x_oct, params_oct, eps_oct)
    return (y_f, y_o, xr_f, xr_o, z_f, mu_f, lv_f, z_o, mu_o, lv_o)


# ----------------------------------------------------------------------------
if __name__ == "__main__":
    key = jax.random.PRNGKey(0)
    kx_oct, kx_fun, ke_fun, ke_oct = jax.random.split(key, 4)

    # PyTorch-style NCHW inputs
    x_oct = jax.random.normal(kx_oct, (B, C_IN, H, W), jnp.float32)
    x_fundus = jax.random.normal(kx_fun, (B, C_IN, H, W), jnp.float32)

    params_fundus = init_branch_params(jax.random.PRNGKey(1))
    params_oct = init_branch_params(jax.random.PRNGKey(2))

    # deterministic reparameterization noise (torch.randn_like equivalent)
    eps_fundus = jax.random.normal(ke_fun, (B, LATENT), jnp.float32)
    eps_oct = jax.random.normal(ke_oct, (B, LATENT), jnp.float32)

    # one-time parameter packing, hoisted out of the per-call jit path
    packed = pack_params(params_fundus, params_oct)

    outs = mcvae_classifier_retina_forward(
        x_oct, x_fundus, eps_fundus, eps_oct, packed)
    outs = jax.block_until_ready(outs)

    (y_f, y_o, xr_f, xr_o, z_f, mu_f, lv_f, z_o, mu_o, lv_o) = outs
    assert y_f.shape == (B, N_CLASSES) and y_o.shape == (B, N_CLASSES)
    assert xr_f.shape == (B, C_IN, H, W) and xr_o.shape == (B, C_IN, H, W)
    assert z_f.shape == mu_f.shape == lv_f.shape == (B, LATENT)
    assert z_o.shape == mu_o.shape == lv_o.shape == (B, LATENT)

    # numerical check against a pure-f32 JAX reference of the same forward pass.
    # Tolerance loosened from 5e-3 because the kernel (per perf review) keeps
    # selectors / conv / head weights + activations in bf16 (f32 accumulation);
    # structural errors would be O(0.1-1) and still be caught.
    refs = reference_forward(x_oct, x_fundus, params_fundus, params_oct,
                             eps_fundus, eps_oct)
    for got, want in zip(outs, refs):
        np.testing.assert_allclose(np.asarray(got), np.asarray(want),
                                   rtol=3e-2, atol=3e-2)

    print("KERNEL_OK")
</pallas_src>

<mosaic_0001>
module attributes {stable_mosaic.version = 11 : i64} {
  func.func @_fused_vae_kernel(%arg0: memref<128x72xbf16, #tpu.memory_space<vmem>>, %arg1: memref<2x64xf32, #tpu.memory_space<vmem>>, %arg2: memref<288x128xbf16, #tpu.memory_space<vmem>>, %arg3: memref<72x16xbf16, #tpu.memory_space<vmem>>, %arg4: memref<1x16xf32, #tpu.memory_space<vmem>>, %arg5: memref<9x16x32xbf16, #tpu.memory_space<vmem>>, %arg6: memref<1x32xf32, #tpu.memory_space<vmem>>, %arg7: memref<512x128xf32, #tpu.memory_space<vmem>>, %arg8: memref<1x128xf32, #tpu.memory_space<vmem>>, %arg9: memref<64x2304xbf16, #tpu.memory_space<vmem>>, %arg10: memref<1x2304xf32, #tpu.memory_space<vmem>>, %arg11: memref<2x256xf32, #tpu.memory_space<vmem>>, %arg12: memref<2x2304xf32, #tpu.memory_space<vmem>>) attributes {dimension_semantics = [], scalar_prefetch = 0 : i64, scratch_operands = 0 : i64, tpu.core_type = #tpu.core_type<tc>} {
    %c0 = arith.constant 0 : index
    %c0_0 = arith.constant 0 : index
    %0 = vector.load %arg0[%c0, %c0_0] : memref<128x72xbf16, #tpu.memory_space<vmem>>, vector<128x72xbf16>
    %c0_1 = arith.constant 0 : index
    %c0_2 = arith.constant 0 : index
    %1 = vector.load %arg3[%c0_1, %c0_2] : memref<72x16xbf16, #tpu.memory_space<vmem>>, vector<72x16xbf16>
    %cst = arith.constant dense<0.000000e+00> : vector<128x16xf32>
    %2 = tpu.matmul %0, %1, %cst {dimension_numbers = #tpu.dot_dimension_numbers<[1], [0], [0], [1], [0, 0, 1, 1], [], []>} : vector<128x72xbf16>, vector<72x16xbf16>, vector<128x16xf32> -> vector<128x16xf32>
    %c0_3 = arith.constant 0 : index
    %c0_4 = arith.constant 0 : index
    %3 = vector.load %arg4[%c0_3, %c0_4] : memref<1x16xf32, #tpu.memory_space<vmem>>, vector<1x16xf32>
    %4 = vector.broadcast %3 : vector<1x16xf32> to vector<128x16xf32>
    %5 = arith.addf %2, %4 : vector<128x16xf32>
    %cst_5 = arith.constant 0.000000e+00 : f32
    %6 = vector.broadcast %cst_5 : f32 to vector<128x16xf32>
    %7 = arith.maximumf %5, %6 : vector<128x16xf32>
    %8 = arith.truncf %7 : vector<128x16xf32> to vector<128x16xbf16>
    %c0_6 = arith.constant 0 : index
    %c0_7 = arith.constant 0 : index
    %9 = vector.load %arg2[%c0_6, %c0_7] : memref<288x128xbf16, #tpu.memory_space<vmem>>, vector<288x128xbf16>
    %cst_8 = arith.constant dense<0.000000e+00> : vector<288x16xf32>
    %10 = tpu.matmul %9, %8, %cst_8 {dimension_numbers = #tpu.dot_dimension_numbers<[1], [0], [0], [1], [0, 0, 1, 1], [], []>} : vector<288x128xbf16>, vector<128x16xbf16>, vector<288x16xf32> -> vector<288x16xf32>
    %11 = arith.truncf %10 : vector<288x16xf32> to vector<288x16xbf16>
    %12 = vector.extract_strided_slice %11 {offsets = [0, 0], sizes = [32, 16], strides = [1, 1]} : vector<288x16xbf16> to vector<32x16xbf16>
    %c0_9 = arith.constant 0 : index
    %c0_10 = arith.constant 0 : index
    %c0_11 = arith.constant 0 : index
    %13 = vector.load %arg5[%c0_9, %c0_10, %c0_11] : memref<9x16x32xbf16, #tpu.memory_space<vmem>>, vector<1x16x32xbf16>
    %14 = vector.shape_cast %13 : vector<1x16x32xbf16> to vector<16x32xbf16>
    %cst_12 = arith.constant dense<0.000000e+00> : vector<32x32xf32>
    %15 = tpu.matmul %12, %14, %cst_12 {dimension_numbers = #tpu.dot_dimension_numbers<[1], [0], [0], [1], [0, 0, 1, 1], [], []>} : vector<32x16xbf16>, vector<16x32xbf16>, vector<32x32xf32> -> vector<32x32xf32>
    %16 = vector.extract_strided_slice %11 {offsets = [32, 0], sizes = [32, 16], strides = [1, 1]} : vector<288x16xbf16> to vector<32x16xbf16>
    %c1 = arith.constant 1 : index
    %c0_13 = arith.constant 0 : index
    %c0_14 = arith.constant 0 : index
    %17 = vector.load %arg5[%c1, %c0_13, %c0_14] : memref<9x16x32xbf16, #tpu.memory_space<vmem>>, vector<1x16x32xbf16>
    %18 = vector.shape_cast %17 : vector<1x16x32xbf16> to vector<16x32xbf16>
    %cst_15 = arith.constant dense<0.000000e+00> : vector<32x32xf32>
    %19 = tpu.matmul %16, %18, %cst_15 {dimension_numbers = #tpu.dot_dimension_numbers<[1], [0], [0], [1], [0, 0, 1, 1], [], []>} : vector<32x16xbf16>, vector<16x32xbf16>, vector<32x32xf32> -> vector<32x32xf32>
    %20 = vector.extract_strided_slice %11 {offsets = [64, 0], sizes = [32, 16], strides = [1, 1]} : vector<288x16xbf16> to vector<32x16xbf16>
    %c2 = arith.constant 2 : index
    %c0_16 = arith.constant 0 : index
    %c0_17 = arith.constant 0 : index
    %21 = vector.load %arg5[%c2, %c0_16, %c0_17] : memref<9x16x32xbf16, #tpu.memory_space<vmem>>, vector<1x16x32xbf16>
    %22 = vector.shape_cast %21 : vector<1x16x32xbf16> to vector<16x32xbf16>
    %cst_18 = arith.constant dense<0.000000e+00> : vector<32x32xf32>
    %23 = tpu.matmul %20, %22, %cst_18 {dimension_numbers = #tpu.dot_dimension_numbers<[1], [0], [0], [1], [0, 0, 1, 1], [], []>} : vector<32x16xbf16>, vector<16x32xbf16>, vector<32x32xf32> -> vector<32x32xf32>
    %24 = vector.extract_strided_slice %11 {offsets = [96, 0], sizes = [32, 16], strides = [1, 1]} : vector<288x16xbf16> to vector<32x16xbf16>
    %c3 = arith.constant 3 : index
    %c0_19 = arith.constant 0 : index
    %c0_20 = arith.constant 0 : index
    %25 = vector.load %arg5[%c3, %c0_19, %c0_20] : memref<9x16x32xbf16, #tpu.memory_space<vmem>>, vector<1x16x32xbf16>
    %26 = vector.shape_cast %25 : vector<1x16x32xbf16> to vector<16x32xbf16>
    %cst_21 = arith.constant dense<0.000000e+00> : vector<32x32xf32>
    %27 = tpu.matmul %24, %26, %cst_21 {dimension_numbers = #tpu.dot_dimension_numbers<[1], [0], [0], [1], [0, 0, 1, 1], [], []>} : vector<32x16xbf16>, vector<16x32xbf16>, vector<32x32xf32> -> vector<32x32xf32>
    %28 = vector.extract_strided_slice %11 {offsets = [128, 0], sizes = [32, 16], strides = [1, 1]} : vector<288x16xbf16> to vector<32x16xbf16>
    %c4 = arith.constant 4 : index
    %c0_22 = arith.constant 0 : index
    %c0_23 = arith.constant 0 : index
    %29 = vector.load %arg5[%c4, %c0_22, %c0_23] : memref<9x16x32xbf16, #tpu.memory_space<vmem>>, vector<1x16x32xbf16>
    %30 = vector.shape_cast %29 : vector<1x16x32xbf16> to vector<16x32xbf16>
    %cst_24 = arith.constant dense<0.000000e+00> : vector<32x32xf32>
    %31 = tpu.matmul %28, %30, %cst_24 {dimension_numbers = #tpu.dot_dimension_numbers<[1], [0], [0], [1], [0, 0, 1, 1], [], []>} : vector<32x16xbf16>, vector<16x32xbf16>, vector<32x32xf32> -> vector<32x32xf32>
    %32 = vector.extract_strided_slice %11 {offsets = [160, 0], sizes = [32, 16], strides = [1, 1]} : vector<288x16xbf16> to vector<32x16xbf16>
    %c5 = arith.constant 5 : index
    %c0_25 = arith.constant 0 : index
    %c0_26 = arith.constant 0 : index
    %33 = vector.load %arg5[%c5, %c0_25, %c0_26] : memref<9x16x32xbf16, #tpu.memory_space<vmem>>, vector<1x16x32xbf16>
    %34 = vector.shape_cast %33 : vector<1x16x32xbf16> to vector<16x32xbf16>
    %cst_27 = arith.constant dense<0.000000e+00> : vector<32x32xf32>
    %35 = tpu.matmul %32, %34, %cst_27 {dimension_numbers = #tpu.dot_dimension_numbers<[1], [0], [0], [1], [0, 0, 1, 1], [], []>} : vector<32x16xbf16>, vector<16x32xbf16>, vector<32x32xf32> -> vector<32x32xf32>
    %36 = vector.extract_strided_slice %11 {offsets = [192, 0], sizes = [32, 16], strides = [1, 1]} : vector<288x16xbf16> to vector<32x16xbf16>
    %c6 = arith.constant 6 : index
    %c0_28 = arith.constant 0 : index
    %c0_29 = arith.constant 0 : index
    %37 = vector.load %arg5[%c6, %c0_28, %c0_29] : memref<9x16x32xbf16, #tpu.memory_space<vmem>>, vector<1x16x32xbf16>
    %38 = vector.shape_cast %37 : vector<1x16x32xbf16> to vector<16x32xbf16>
    %cst_30 = arith.constant dense<0.000000e+00> : vector<32x32xf32>
    %39 = tpu.matmul %36, %38, %cst_30 {dimension_numbers = #tpu.dot_dimension_numbers<[1], [0], [0], [1], [0, 0, 1, 1], [], []>} : vector<32x16xbf16>, vector<16x32xbf16>, vector<32x32xf32> -> vector<32x32xf32>
    %40 = vector.extract_strided_slice %11 {offsets = [224, 0], sizes = [32, 16], strides = [1, 1]} : vector<288x16xbf16> to vector<32x16xbf16>
    %c7 = arith.constant 7 : index
    %c0_31 = arith.constant 0 : index
    %c0_32 = arith.constant 0 : index
    %41 = vector.load %arg5[%c7, %c0_31, %c0_32] : memref<9x16x32xbf16, #tpu.memory_space<vmem>>, vector<1x16x32xbf16>
    %42 = vector.shape_cast %41 : vector<1x16x32xbf16> to vector<16x32xbf16>
    %cst_33 = arith.constant dense<0.000000e+00> : vector<32x32xf32>
    %43 = tpu.matmul %40, %42, %cst_33 {dimension_numbers = #tpu.dot_dimension_numbers<[1], [0], [0], [1], [0, 0, 1, 1], [], []>} : vector<32x16xbf16>, vector<16x32xbf16>, vector<32x32xf32> -> vector<32x32xf32>
    %44 = vector.extract_strided_slice %11 {offsets = [256, 0], sizes = [32, 16], strides = [1, 1]} : vector<288x16xbf16> to vector<32x16xbf16>
    %c8 = arith.constant 8 : index
    %c0_34 = arith.constant 0 : index
    %c0_35 = arith.constant 0 : index
    %45 = vector.load %arg5[%c8, %c0_34, %c0_35] : memref<9x16x32xbf16, #tpu.memory_space<vmem>>, vector<1x16x32xbf16>
    %46 = vector.shape_cast %45 : vector<1x16x32xbf16> to vector<16x32xbf16>
    %cst_36 = arith.constant dense<0.000000e+00> : vector<32x32xf32>
    %47 = tpu.matmul %44, %46, %cst_36 {dimension_numbers = #tpu.dot_dimension_numbers<[1], [0], [0], [1], [0, 0, 1, 1], [], []>} : vector<32x16xbf16>, vector<16x32xbf16>, vector<32x32xf32> -> vector<32x32xf32>
    %48 = arith.addf %15, %19 : vector<32x32xf32>
    %49 = arith.addf %23, %27 : vector<32x32xf32>
    %50 = arith.addf %31, %35 : vector<32x32xf32>
    %51 = arith.addf %39, %43 : vector<32x32xf32>
    %52 = arith.addf %48, %49 : vector<32x32xf32>
    %53 = arith.addf %50, %51 : vector<32x32xf32>
    %54 = arith.addf %52, %53 : vector<32x32xf32>
    %55 = arith.addf %54, %47 : vector<32x32xf32>
    %c0_37 = arith.constant 0 : index
    %c0_38 = arith.constant 0 : index
    %56 = vector.load %arg6[%c0_37, %c0_38] : memref<1x32xf32, #tpu.memory_space<vmem>>, vector<1x32xf32>
    %57 = vector.broadcast %56 : vector<1x32xf32> to vector<32x32xf32>
    %58 = arith.addf %55, %57 : vector<32x32xf32>
    %cst_39 = arith.constant 0.000000e+00 : f32
    %59 = vector.broadcast %cst_39 : f32 to vector<32x32xf32>
    %60 = arith.maximumf %58, %59 : vector<32x32xf32>
    %61 = vector.extract_strided_slice %60 {offsets = [0, 0], sizes = [2, 16], strides = [1, 1]} : vector<32x32xf32> to vector<2x16xf32>
    %62 = vector.extract_strided_slice %60 {offsets = [2, 0], sizes = [2, 16], strides = [1, 1]} : vector<32x32xf32> to vector<2x16xf32>
    %63 = vector.extract_strided_slice %60 {offsets = [4, 0], sizes = [2, 16], strides = [1, 1]} : vector<32x32xf32> to vector<2x16xf32>
    %64 = vector.extract_strided_slice %60 {offsets = [6, 0], sizes = [2, 16], strides = [1, 1]} : vector<32x32xf32> to vector<2x16xf32>
    %65 = vector.extract_strided_slice %60 {offsets = [8, 0], sizes = [2, 16], strides = [1, 1]} : vector<32x32xf32> to vector<2x16xf32>
    %66 = vector.extract_strided_slice %60 {offsets = [10, 0], sizes = [2, 16], strides = [1, 1]} : vector<32x32xf32> to vector<2x16xf32>
    %67 = vector.extract_strided_slice %60 {offsets = [12, 0], sizes = [2, 16], strides = [1, 1]} : vector<32x32xf32> to vector<2x16xf32>
    %68 = vector.extract_strided_slice %60 {offsets = [14, 0], sizes = [2, 16], strides = [1, 1]} : vector<32x32xf32> to vector<2x16xf32>
    %69 = vector.extract_strided_slice %60 {offsets = [16, 0], sizes = [2, 16], strides = [1, 1]} : vector<32x32xf32> to vector<2x16xf32>
    %70 = vector.extract_strided_slice %60 {offsets = [18, 0], sizes = [2, 16], strides = [1, 1]} : vector<32x32xf32> to vector<2x16xf32>
    %71 = vector.extract_strided_slice %60 {offsets = [20, 0], sizes = [2, 16], strides = [1, 1]} : vector<32x32xf32> to vector<2x16xf32>
    %72 = vector.extract_strided_slice %60 {offsets = [22, 0], sizes = [2, 16], strides = [1, 1]} : vector<32x32xf32> to vector<2x16xf32>
    %73 = vector.extract_strided_slice %60 {offsets = [24, 0], sizes = [2, 16], strides = [1, 1]} : vector<32x32xf32> to vector<2x16xf32>
    %74 = vector.extract_strided_slice %60 {offsets = [26, 0], sizes = [2, 16], strides = [1, 1]} : vector<32x32xf32> to vector<2x16xf32>
    %75 = vector.extract_strided_slice %60 {offsets = [28, 0], sizes = [2, 16], strides = [1, 1]} : vector<32x32xf32> to vector<2x16xf32>
    %76 = vector.extract_strided_slice %60 {offsets = [30, 0], sizes = [2, 16], strides = [1, 1]} : vector<32x32xf32> to vector<2x16xf32>
    %77 = vector.extract_strided_slice %60 {offsets = [0, 16], sizes = [2, 16], strides = [1, 1]} : vector<32x32xf32> to vector<2x16xf32>
    %78 = vector.extract_strided_slice %60 {offsets = [2, 16], sizes = [2, 16], strides = [1, 1]} : vector<32x32xf32> to vector<2x16xf32>
    %79 = vector.extract_strided_slice %60 {offsets = [4, 16], sizes = [2, 16], strides = [1, 1]} : vector<32x32xf32> to vector<2x16xf32>
    %80 = vector.extract_strided_slice %60 {offsets = [6, 16], sizes = [2, 16], strides = [1, 1]} : vector<32x32xf32> to vector<2x16xf32>
    %81 = vector.extract_strided_slice %60 {offsets = [8, 16], sizes = [2, 16], strides = [1, 1]} : vector<32x32xf32> to vector<2x16xf32>
    %82 = vector.extract_strided_slice %60 {offsets = [10, 16], sizes = [2, 16], strides = [1, 1]} : vector<32x32xf32> to vector<2x16xf32>
    %83 = vector.extract_strided_slice %60 {offsets = [12, 16], sizes = [2, 16], strides = [1, 1]} : vector<32x32xf32> to vector<2x16xf32>
    %84 = vector.extract_strided_slice %60 {offsets = [14, 16], sizes = [2, 16], strides = [1, 1]} : vector<32x32xf32> to vector<2x16xf32>
    %85 = vector.extract_strided_slice %60 {offsets = [16, 16], sizes = [2, 16], strides = [1, 1]} : vector<32x32xf32> to vector<2x16xf32>
    %86 = vector.extract_strided_slice %60 {offsets = [18, 16], sizes = [2, 16], strides = [1, 1]} : vector<32x32xf32> to vector<2x16xf32>
    %87 = vector.extract_strided_slice %60 {offsets = [20, 16], sizes = [2, 16], strides = [1, 1]} : vector<32x32xf32> to vector<2x16xf32>
    %88 = vector.extract_strided_slice %60 {offsets = [22, 16], sizes = [2, 16], strides = [1, 1]} : vector<32x32xf32> to vector<2x16xf32>
    %89 = vector.extract_strided_slice %60 {offsets = [24, 16], sizes = [2, 16], strides = [1, 1]} : vector<32x32xf32> to vector<2x16xf32>
    %90 = vector.extract_strided_slice %60 {offsets = [26, 16], sizes = [2, 16], strides = [1, 1]} : vector<32x32xf32> to vector<2x16xf32>
    %91 = vector.extract_strided_slice %60 {offsets = [28, 16], sizes = [2, 16], strides = [1, 1]} : vector<32x32xf32> to vector<2x16xf32>
    %92 = vector.extract_strided_slice %60 {offsets = [30, 16], sizes = [2, 16], strides = [1, 1]} : vector<32x32xf32> to vector<2x16xf32>
    %93 = tpu.concatenate %61, %62, %63, %64, %65, %66, %67, %68, %69, %70, %71, %72, %73, %74, %75, %76 in 1 : vector<2x16xf32>, vector<2x16xf32>, vector<2x16xf32>, vector<2x16xf32>, vector<2x16xf32>, vector<2x16xf32>, vector<2x16xf32>, vector<2x16xf32>, vector<2x16xf32>, vector<2x16xf32>, vector<2x16xf32>, vector<2x16xf32>, vector<2x16xf32>, vector<2x16xf32>, vector<2x16xf32>, vector<2x16xf32> -> vector<2x256xf32>
    %94 = tpu.concatenate %77, %78, %79, %80, %81, %82, %83, %84, %85, %86, %87, %88, %89, %90, %91, %92 in 1 : vector<2x16xf32>, vector<2x16xf32>, vector<2x16xf32>, vector<2x16xf32>, vector<2x16xf32>, vector<2x16xf32>, vector<2x16xf32>, vector<2x16xf32>, vector<2x16xf32>, vector<2x16xf32>, vector<2x16xf32>, vector<2x16xf32>, vector<2x16xf32>, vector<2x16xf32>, vector<2x16xf32>, vector<2x16xf32> -> vector<2x256xf32>
    %95 = tpu.concatenate %93, %94 in 1 : vector<2x256xf32>, vector<2x256xf32> -> vector<2x512xf32>
    %c0_40 = arith.constant 0 : index
    %c0_41 = arith.constant 0 : index
    %96 = vector.load %arg7[%c0_40, %c0_41] : memref<512x128xf32, #tpu.memory_space<vmem>>, vector<512x128xf32>
    %cst_42 = arith.constant dense<0.000000e+00> : vector<2x128xf32>
    %97 = tpu.matmul %95, %96, %cst_42 {dimension_numbers = #tpu.dot_dimension_numbers<[1], [0], [0], [1], [0, 0, 1, 1], [], []>} : vector<2x512xf32>, vector<512x128xf32>, vector<2x128xf32> -> vector<2x128xf32>
    %c0_43 = arith.constant 0 : index
    %c0_44 = arith.constant 0 : index
    %98 = vector.load %arg8[%c0_43, %c0_44] : memref<1x128xf32, #tpu.memory_space<vmem>>, vector<1x128xf32>
    %99 = vector.broadcast %98 : vector<1x128xf32> to vector<2x128xf32>
    %100 = arith.addf %97, %99 : vector<2x128xf32>
    %101 = vector.extract_strided_slice %100 {offsets = [0, 0], sizes = [2, 64], strides = [1, 1]} : vector<2x128xf32> to vector<2x64xf32>
    %102 = vector.extract_strided_slice %100 {offsets = [0, 64], sizes = [2, 64], strides = [1, 1]} : vector<2x128xf32> to vector<2x64xf32>
    %c0_45 = arith.constant 0 : index
    %c0_46 = arith.constant 0 : index
    %103 = vector.load %arg1[%c0_45, %c0_46] : memref<2x64xf32, #tpu.memory_space<vmem>>, vector<2x64xf32>
    %cst_47 = arith.constant 5.000000e-01 : f32
    %104 = vector.broadcast %cst_47 : f32 to vector<2x64xf32>
    %105 = arith.mulf %104, %102 : vector<2x64xf32>
    %106 = math.exp %105 : vector<2x64xf32>
    %107 = arith.mulf %103, %106 : vector<2x64xf32>
    %108 = arith.addf %101, %107 : vector<2x64xf32>
    %cst_48 = arith.constant 0.000000e+00 : f32
    %109 = vector.broadcast %cst_48 : f32 to vector<2x64xf32>
    %110 = tpu.concatenate %101, %102, %108, %109 in 1 : vector<2x64xf32>, vector<2x64xf32>, vector<2x64xf32>, vector<2x64xf32> -> vector<2x256xf32>
    %c0_49 = arith.constant 0 : index
    %c0_50 = arith.constant 0 : index
    %111 = vector.load %arg11[%c0_49, %c0_50] : memref<2x256xf32, #tpu.memory_space<vmem>>, vector<2x256xf32>
    tpu.vector_store %arg11[%c0_49, %c0_50], %110 {strides = array<i32>} : memref<2x256xf32, #tpu.memory_space<vmem>>, vector<2x256xf32>,
    %112 = arith.truncf %108 : vector<2x64xf32> to vector<2x64xbf16>
    %c0_51 = arith.constant 0 : index
    %c0_52 = arith.constant 0 : index
    %113 = vector.load %arg9[%c0_51, %c0_52] : memref<64x2304xbf16, #tpu.memory_space<vmem>>, vector<64x2304xbf16>
    %cst_53 = arith.constant dense<0.000000e+00> : vector<2x2304xf32>
    %114 = tpu.matmul %112, %113, %cst_53 {dimension_numbers = #tpu.dot_dimension_numbers<[1], [0], [0], [1], [0, 0, 1, 1], [], []>} : vector<2x64xbf16>, vector<64x2304xbf16>, vector<2x2304xf32> -> vector<2x2304xf32>
    %c0_54 = arith.constant 0 : index
    %c0_55 = arith.constant 0 : index
    %115 = vector.load %arg10[%c0_54, %c0_55] : memref<1x2304xf32, #tpu.memory_space<vmem>>, vector<1x2304xf32>
    %116 = vector.broadcast %115 : vector<1x2304xf32> to vector<2x2304xf32>
    %117 = arith.addf %114, %116 : vector<2x2304xf32>
    %118 = tpu.iota {dimensions = array<i32: 1>} : vector<2x2304xi32>
    %c256_i32 = arith.constant 256 : i32
    %119 = vector.broadcast %c256_i32 : i32 to vector<2x2304xi32>
    %120 = arith.cmpi slt, %118, %119 : vector<2x2304xi32>
    %121 = arith.negf %117 : vector<2x2304xf32>
    %122 = math.exp %121 : vector<2x2304xf32>
    %cst_56 = arith.constant 1.000000e+00 : f32
    %123 = vector.broadcast %cst_56 : f32 to vector<2x2304xf32>
    %124 = arith.addf %123, %122 : vector<2x2304xf32>
    %125 = arith.divf %123, %124 : vector<2x2304xf32>
    %126 = arith.select %120, %117, %125 : vector<2x2304xi1>, vector<2x2304xf32>
    %c0_57 = arith.constant 0 : index
    %c0_58 = arith.constant 0 : index
    %127 = vector.load %arg12[%c0_57, %c0_58] : memref<2x2304xf32, #tpu.memory_space<vmem>>, vector<2x2304xf32>
    tpu.vector_store %arg12[%c0_57, %c0_58], %126 {strides = array<i32>} : memref<2x2304xf32, #tpu.memory_space<vmem>>, vector<2x2304xf32>,
    return
  }
}

</mosaic_0001>

<llo_original>
// kernel: mcvae_classifier_retina_forward.1
$region0: #{mcvae_classifier_retina_forward.1}
  #allocation0 [shape = 'u32[]', space=smem, size = 0x4, offset = 0x4, fixed_abs, tag = 'smem constant byte address 0x4 - core index']
  #allocation1 [shape = 'u32[144,128]{1,0:T(1,128)}', space=vmem, size = 0x12000, scoped, tag = 'internal scratch']
  %s0 = inlined_call_operand.vmem [shape: bf16[128,72], index: 0, kind: input, shape index: {}]
  %s1 = inlined_call_operand.vmem [shape: f32[2,64], index: 1, kind: input, shape index: {}]
  %s2 = inlined_call_operand.vmem [shape: bf16[288,128], index: 2, kind: input, shape index: {}]
  %s3 = inlined_call_operand.vmem [shape: bf16[72,16], index: 3, kind: input, shape index: {}]
  %s4 = inlined_call_operand.vmem [shape: f32[1,16], index: 4, kind: input, shape index: {}]
  %s5 = inlined_call_operand.vmem [shape: bf16[9,16,32], index: 5, kind: input, shape index: {}]
  %s6 = inlined_call_operand.vmem [shape: f32[1,32], index: 6, kind: input, shape index: {}]
  %s7 = inlined_call_operand.vmem [shape: f32[512,128], index: 7, kind: input, shape index: {}]
  %s8 = inlined_call_operand.vmem [shape: f32[1,128], index: 8, kind: input, shape index: {}]
  %s9 = inlined_call_operand.vmem [shape: bf16[64,2304], index: 9, kind: input, shape index: {}]
  %s10 = inlined_call_operand.vmem [shape: f32[1,2304], index: 10, kind: input, shape index: {}]
  %s11 = inlined_call_operand.vmem [shape: f32[2,256], index: 11, kind: output, shape index: {0}]
  %s12 = inlined_call_operand.vmem [shape: f32[2,2304], index: 12, kind: output, shape index: {1}]
  %13 = xla_tuple %s11, %s12
  %s14 = sld [smem:[#allocation0]]
  $region62: #{mcvae_classifier_retina_forward.1} parent=0
    _
  %s16 = ssub.s32 1, %s14
  %s17 = scalar_select 0, %s16, %s14
  // Predicated region
  $region2: #{mcvae_classifier_retina_forward.1} parent=0 // pred_check
    _
  $region3: #{mcvae_classifier_retina_forward.1} parent=0 // pred_check_branch
    %19 = sbr.rel (0) target = $region5
  $region4: #{mcvae_classifier_retina_forward.1} parent=0 // pred_region
    _
  $region5: #{mcvae_classifier_retina_forward.1} parent=0 // pred_fallthru
    _
  // Predicated region
  $region6: #{mcvae_classifier_retina_forward.1} parent=0 // pred_check
    _
  $region7: #{mcvae_classifier_retina_forward.1} parent=0 // pred_check_branch
    %21 = sbr.rel (0) target = $region9
  $region8: #{mcvae_classifier_retina_forward.1} parent=0 // pred_region
    _
  $region9: #{mcvae_classifier_retina_forward.1} parent=0 // pred_fallthru
    _
  // Predicated region
  $region10: #{mcvae_classifier_retina_forward.1} parent=0 // pred_check
    _
  $region11: #{mcvae_classifier_retina_forward.1} parent=0 // pred_check_branch
    %23 = sbr.rel (0) target = $region13
  $region12: #{mcvae_classifier_retina_forward.1} parent=0 // pred_region
    _
  $region13: #{mcvae_classifier_retina_forward.1} parent=0 // pred_fallthru
    _
  // Predicated region
  $region14: #{mcvae_classifier_retina_forward.1} parent=0 // pred_check
    _
  $region15: #{mcvae_classifier_retina_forward.1} parent=0 // pred_check_branch
    %25 = sbr.rel (0) target = $region17
  $region16: #{mcvae_classifier_retina_forward.1} parent=0 // pred_region
    _
  $region17: #{mcvae_classifier_retina_forward.1} parent=0 // pred_fallthru
    _
  // Predicated region
  $region18: #{mcvae_classifier_retina_forward.1} parent=0 // pred_check
    _
  $region19: #{mcvae_classifier_retina_forward.1} parent=0 // pred_check_branch
    %27 = sbr.rel (0) target = $region21
  $region20: #{mcvae_classifier_retina_forward.1} parent=0 // pred_region
    _
  $region21: #{mcvae_classifier_retina_forward.1} parent=0 // pred_fallthru
    _
  // Predicated region
  $region22: #{mcvae_classifier_retina_forward.1} parent=0 // pred_check
    _
  $region23: #{mcvae_classifier_retina_forward.1} parent=0 // pred_check_branch
    %29 = sbr.rel (0) target = $region25
  $region24: #{mcvae_classifier_retina_forward.1} parent=0 // pred_region
    _
  $region25: #{mcvae_classifier_retina_forward.1} parent=0 // pred_fallthru
    _
  // Predicated region
  $region26: #{mcvae_classifier_retina_forward.1} parent=0 // pred_check
    _
  $region27: #{mcvae_classifier_retina_forward.1} parent=0 // pred_check_branch
    %31 = sbr.rel (0) target = $region29
  $region28: #{mcvae_classifier_retina_forward.1} parent=0 // pred_region
    _
  $region29: #{mcvae_classifier_retina_forward.1} parent=0 // pred_fallthru
    _
  // Predicated region
  $region30: #{mcvae_classifier_retina_forward.1} parent=0 // pred_check
    _
  $region31: #{mcvae_classifier_retina_forward.1} parent=0 // pred_check_branch
    %33 = sbr.rel (0) target = $region33
  $region32: #{mcvae_classifier_retina_forward.1} parent=0 // pred_region
    _
  $region33: #{mcvae_classifier_retina_forward.1} parent=0 // pred_fallthru
    _
  // Predicated region
  $region34: #{mcvae_classifier_retina_forward.1} parent=0 // pred_check
    _
  $region35: #{mcvae_classifier_retina_forward.1} parent=0 // pred_check_branch
    %35 = sbr.rel (0) target = $region37
  $region36: #{mcvae_classifier_retina_forward.1} parent=0 // pred_region
    _
  $region37: #{mcvae_classifier_retina_forward.1} parent=0 // pred_fallthru
    _
  // Predicated region
  $region38: #{mcvae_classifier_retina_forward.1} parent=0 // pred_check
    _
  $region39: #{mcvae_classifier_retina_forward.1} parent=0 // pred_check_branch
    %37 = sbr.rel (0) target = $region41
  $region40: #{mcvae_classifier_retina_forward.1} parent=0 // pred_region
    _
  $region41: #{mcvae_classifier_retina_forward.1} parent=0 // pred_fallthru
    _
  // Predicated region
  $region42: #{mcvae_classifier_retina_forward.1} parent=0 // pred_check
    _
  $region43: #{mcvae_classifier_retina_forward.1} parent=0 // pred_check_branch
    %39 = sbr.rel (0) target = $region45
  $region44: #{mcvae_classifier_retina_forward.1} parent=0 // pred_region
    _
  $region45: #{mcvae_classifier_retina_forward.1} parent=0 // pred_fallthru
    _
  %v41 = vld [vmem:[%s0] sm:$0xf]
  %v42 = vld [vmem:[%s0 + $0x4] sm:$0xf]
  %v43 = vld [vmem:[%s0 + $0x8] sm:$0xf]
  %v44 = vld [vmem:[%s0 + $0xc] sm:$0xf]
  %v45 = vld [vmem:[%s0 + $0x10] sm:$0xf]
  %v46 = vld [vmem:[%s0 + $0x14] sm:$0xf]
  %v47 = vld [vmem:[%s0 + $0x18] sm:$0xf]
  %v48 = vld [vmem:[%s0 + $0x1c] sm:$0xf]
  %v49 = vld [vmem:[%s0 + $0x20] sm:$0xf]
  %v50 = vld [vmem:[%s0 + $0x24] sm:$0xf]
  %v51 = vld [vmem:[%s0 + $0x28] sm:$0xf]
  %v52 = vld [vmem:[%s0 + $0x2c] sm:$0xf]
  %v53 = vld [vmem:[%s0 + $0x30] sm:$0xf]
  %v54 = vld [vmem:[%s0 + $0x34] sm:$0xf]
  %v55 = vld [vmem:[%s0 + $0x38] sm:$0xf]
  %v56 = vld [vmem:[%s0 + $0x3c] sm:$0xf]
  %v57 = vld [vmem:[%s3] sm:$0xf]
  %v58 = vld [vmem:[%s3 + $0x4] sm:$0xf]
  %v59 = vld [vmem:[%s3 + $0x8] sm:$0xf]
  %v60 = vld [vmem:[%s3 + $0xc] sm:$0xf]
  %v61 = vld [vmem:[%s3 + $0x10] sm:$0xf]
  %v62 = vld [vmem:[%s3 + $0x14] sm:$0xf]
  %v63 = vld [vmem:[%s3 + $0x18] sm:$0xf]
  %v64 = vld [vmem:[%s3 + $0x1c] sm:$0xf]
  %v65 = vld [vmem:[%s3 + $0x20] sm:$0xf]
  %v66 = vld [vmem:[%s4] sm:$0x1]
  %v68 = vlaneseq
  %v69 = vshrl.u32 %v68, 7
  %v70 = vsub.s32 0, %v69
  %v71 = vrot.slane %v66, %v70
  %v89 = vunpack.c.l.b16 %v41
  %v90 = vunpack.c.l.b16 %v42
  %v91 = vunpack.c.l.b16 %v43
  %v92 = vunpack.c.l.b16 %v44
  %v93 = vunpack.c.l.b16 %v45
  %v94 = vunpack.c.l.b16 %v46
  %v95 = vunpack.c.l.b16 %v47
  %v96 = vunpack.c.l.b16 %v48
  %v97 = vunpack.c.l.b16 %v49
  %v98 = vunpack.c.l.b16 %v50
  %v99 = vunpack.c.l.b16 %v51
  %v100 = vunpack.c.l.b16 %v52
  %v101 = vunpack.c.l.b16 %v53
  %v102 = vunpack.c.l.b16 %v54
  %v103 = vunpack.c.l.b16 %v55
  %v104 = vunpack.c.l.b16 %v56
  %v105 = vpack.c.b16 %v90, %v89
  %v106 = vpack.c.b16 %v92, %v91
  %v107 = vpack.c.b16 %v94, %v93
  %v108 = vpack.c.b16 %v96, %v95
  %v109 = vpack.c.b16 %v98, %v97
  %v110 = vpack.c.b16 %v100, %v99
  %v111 = vpack.c.b16 %v102, %v101
  %v112 = vpack.c.b16 %v104, %v103
  %v122 = vunpack.c.l.b16 %v57
  %v123 = vunpack.c.l.b16 %v58
  %v124 = vunpack.c.l.b16 %v59
  %v125 = vunpack.c.l.b16 %v60
  %v126 = vunpack.c.l.b16 %v61
  %v127 = vunpack.c.l.b16 %v62
  %v128 = vunpack.c.l.b16 %v63
  %v129 = vunpack.c.l.b16 %v64
  %v130 = vunpack.c.l.b16 %v65
  %v131 = vpack.c.b16 %v123, %v122
  %v132 = vpack.c.b16 %v125, %v124
  %v133 = vpack.c.b16 %v127, %v126
  %v134 = vpack.c.b16 %v129, %v128
  %v135 = vpack.c.b16 %v130, %v130
  %vm140 = vcmask 588800
  %v142 = vsel %vm140, %v105, 0
  %v145 = vsel %vm140, %v106, 0
  %v148 = vsel %vm140, %v107, 0
  %v151 = vsel %vm140, %v108, 0
  %v154 = vsel %vm140, %v109, 0
  %v157 = vsel %vm140, %v110, 0
  %v160 = vsel %vm140, %v111, 0
  %v163 = vsel %vm140, %v112, 0
  %vm165 = vcmask 1043456
  %v167 = vsel %vm165, %v135, 0
  %169 = vmatprep.subr.bf16.mxu0 0
  %170 = vmatpush1.bf16.msra.mxu0 0
  %171 = vmatprep.subr.bf16.mxu0 0
  %172 = vmatpush1.bf16.msra.mxu0 0
  %173 = vmatprep.subr.bf16.mxu0 0
  %174 = vmatpush1.bf16.msra.mxu0 0
  %175 = vmatprep.subr.bf16.mxu0 0
  %176 = vmatpush1.bf16.msra.mxu0 %v167
  %177 = vmatprep.subr.bf16.mxu0 0
  %178 = vmatpush1.bf16.msra.mxu0 %v134
  %179 = vmatprep.subr.bf16.mxu0 0
  %180 = vmatpush1.bf16.msra.mxu0 %v133
  %181 = vmatprep.subr.bf16.mxu0 0
  %182 = vmatpush1.bf16.msra.mxu0 %v132
  %183 = vmatprep.subr.bf16.mxu0 0
  %184 = vmatpush1.bf16.msra.mxu0 %v131
  %185 = vmatprep.subr.bf16.mxu0 0
  %186 = vmatpush2.bf16.msra.mxu0 0
  %187 = vmatprep.subr.bf16.mxu0 0
  %188 = vmatpush2.bf16.msra.mxu0 0
  %189 = vmatprep.subr.bf16.mxu0 0
  %190 = vmatpush2.bf16.msra.mxu0 0
  %191 = vmatprep.subr.bf16.mxu0 0
  %192 = vmatpush2.bf16.msra.mxu0 0
  %193 = vmatprep.subr.bf16.mxu0 0
  %194 = vmatpush2.bf16.msra.mxu0 0
  %195 = vmatprep.subr.bf16.mxu0 0
  %196 = vmatpush2.bf16.msra.mxu0 0
  %197 = vmatprep.subr.bf16.mxu0 0
  %198 = vmatpush2.bf16.msra.mxu0 0
  %199 = vmatprep.subr.bf16.mxu0 0
  %200 = vmatpush2.bf16.msra.mxu0 0
  %201 = vmatprep.mubr.bf16.mxu0 0
  %202 = vmatmul.mubr.bf16.gmra.mxu0 %v142
  %v203 = vpop.f32.mrf.mxu0
  %v204 = vadd.f32 %v71, %v203
  %v205 = vpop.f32.mrf.mxu0
  %v206 = vpop.f32.mrf.mxu0
  %v207 = vadd.f32 %v71, %v206
  %v208 = vpop.f32.mrf.mxu0
  %209 = vmatprep.mubr.bf16.mxu0 0
  %210 = vmatmul.mubr.bf16.gmra.mxu0 %v145
  %v211 = vpop.f32.mrf.mxu0
  %v212 = vadd.f32 %v71, %v211
  %v213 = vpop.f32.mrf.mxu0
  %v214 = vpop.f32.mrf.mxu0
  %v215 = vadd.f32 %v71, %v214
  %v216 = vpop.f32.mrf.mxu0
  %217 = vmatprep.mubr.bf16.mxu0 0
  %218 = vmatmul.mubr.bf16.gmra.mxu0 %v148
  %v219 = vpop.f32.mrf.mxu0
  %v220 = vadd.f32 %v71, %v219
  %v221 = vpop.f32.mrf.mxu0
  %v222 = vpop.f32.mrf.mxu0
  %v223 = vadd.f32 %v71, %v222
  %v224 = vpop.f32.mrf.mxu0
  %225 = vmatprep.mubr.bf16.mxu0 0
  %226 = vmatmul.mubr.bf16.gmra.mxu0 %v151
  %v227 = vpop.f32.mrf.mxu0
  %v228 = vadd.f32 %v71, %v227
  %v229 = vpop.f32.mrf.mxu0
  %v230 = vpop.f32.mrf.mxu0
  %v231 = vadd.f32 %v71, %v230
  %v232 = vpop.f32.mrf.mxu0
  %233 = vmatprep.mubr.bf16.mxu0 0
  %234 = vmatmul.mubr.bf16.gmra.mxu0 %v154
  %v235 = vpop.f32.mrf.mxu0
  %v236 = vadd.f32 %v71, %v235
  %v237 = vpop.f32.mrf.mxu0
  %v238 = vpop.f32.mrf.mxu0
  %v239 = vadd.f32 %v71, %v238
  %v240 = vpop.f32.mrf.mxu0
  %241 = vmatprep.mubr.bf16.mxu0 0
  %242 = vmatmul.mubr.bf16.gmra.mxu0 %v157
  %v243 = vpop.f32.mrf.mxu0
  %v244 = vadd.f32 %v71, %v243
  %v245 = vpop.f32.mrf.mxu0
  %v246 = vpop.f32.mrf.mxu0
  %v247 = vadd.f32 %v71, %v246
  %v248 = vpop.f32.mrf.mxu0
  %249 = vmatprep.mubr.bf16.mxu0 0
  %250 = vmatmul.mubr.bf16.gmra.mxu0 %v160
  %v251 = vpop.f32.mrf.mxu0
  %v252 = vadd.f32 %v71, %v251
  %v253 = vpop.f32.mrf.mxu0
  %v254 = vpop.f32.mrf.mxu0
  %v255 = vadd.f32 %v71, %v254
  %v256 = vpop.f32.mrf.mxu0
  %257 = vmatprep.mubr.bf16.mxu0 0
  %258 = vmatmul.mubr.bf16.gmra.mxu0 %v163
  %v259 = vpop.f32.mrf.mxu0
  %v260 = vadd.f32 %v71, %v259
  %v261 = vpop.f32.mrf.mxu0
  %v262 = vpop.f32.mrf.mxu0
  %v263 = vadd.f32 %v71, %v262
  %v264 = vpop.f32.mrf.mxu0
  %265 = vdwg.mxu0
  %v266 = vmax.f32 %v204, 0.0
  %v267 = vmax.f32 %v207, 0.0
  %v268 = vmax.f32 %v212, 0.0
  %v269 = vmax.f32 %v215, 0.0
  %v270 = vmax.f32 %v220, 0.0
  %v271 = vmax.f32 %v223, 0.0
  %v272 = vmax.f32 %v228, 0.0
  %v273 = vmax.f32 %v231, 0.0
  %v274 = vmax.f32 %v236, 0.0
  %v275 = vmax.f32 %v239, 0.0
  %v276 = vmax.f32 %v244, 0.0
  %v277 = vmax.f32 %v247, 0.0
  %v278 = vmax.f32 %v252, 0.0
  %v279 = vmax.f32 %v255, 0.0
  %v280 = vmax.f32 %v260, 0.0
  %v281 = vmax.f32 %v263, 0.0
  %v282 = vpack.c.bf16 %v267, %v266
  %v283 = vpack.c.bf16 %v269, %v268
  %v284 = vpack.c.bf16 %v271, %v270
  %v285 = vpack.c.bf16 %v273, %v272
  %v286 = vpack.c.bf16 %v275, %v274
  %v287 = vpack.c.bf16 %v277, %v276
  %v288 = vpack.c.bf16 %v279, %v278
  %v289 = vpack.c.bf16 %v281, %v280
  %v290 = vld [vmem:[%s2] sm:$0xf]
  %v291 = vld [vmem:[%s2 + $0x4] sm:$0xf]
  %v292 = vld [vmem:[%s2 + $0x8] sm:$0xf]
  %v293 = vld [vmem:[%s2 + $0xc] sm:$0xf]
  %v294 = vld [vmem:[%s2 + $0x10] sm:$0xf]
  %v295 = vld [vmem:[%s2 + $0x14] sm:$0xf]
  %v296 = vld [vmem:[%s2 + $0x18] sm:$0xf]
  %v297 = vld [vmem:[%s2 + $0x1c] sm:$0xf]
  %v298 = vld [vmem:[%s2 + $0x20] sm:$0xf]
  %v299 = vld [vmem:[%s2 + $0x24] sm:$0xf]
  %v300 = vld [vmem:[%s2 + $0x28] sm:$0xf]
  %v301 = vld [vmem:[%s2 + $0x2c] sm:$0xf]
  %v302 = vld [vmem:[%s2 + $0x30] sm:$0xf]
  %v303 = vld [vmem:[%s2 + $0x34] sm:$0xf]
  %v304 = vld [vmem:[%s2 + $0x38] sm:$0xf]
  %v305 = vld [vmem:[%s2 + $0x3c] sm:$0xf]
  %v306 = vld [vmem:[%s2 + $0x40] sm:$0xf]
  %v307 = vld [vmem:[%s2 + $0x44] sm:$0xf]
  %v308 = vld [vmem:[%s2 + $0x48] sm:$0xf]
  %v309 = vld [vmem:[%s2 + $0x4c] sm:$0xf]
  %v310 = vld [vmem:[%s2 + $0x50] sm:$0xf]
  %v311 = vld [vmem:[%s2 + $0x54] sm:$0xf]
  %v312 = vld [vmem:[%s2 + $0x58] sm:$0xf]
  %v313 = vld [vmem:[%s2 + $0x5c] sm:$0xf]
  %v314 = vld [vmem:[%s2 + $0x60] sm:$0xf]
  %v315 = vld [vmem:[%s2 + $0x64] sm:$0xf]
  %v316 = vld [vmem:[%s2 + $0x68] sm:$0xf]
  %v317 = vld [vmem:[%s2 + $0x6c] sm:$0xf]
  %v318 = vld [vmem:[%s2 + $0x70] sm:$0xf]
  %v319 = vld [vmem:[%s2 + $0x74] sm:$0xf]
  %v320 = vld [vmem:[%s2 + $0x78] sm:$0xf]
  %v321 = vld [vmem:[%s2 + $0x7c] sm:$0xf]
  %v322 = vld [vmem:[%s2 + $0x80] sm:$0xf]
  %v323 = vld [vmem:[%s2 + $0x84] sm:$0xf]
  %v324 = vld [vmem:[%s2 + $0x88] sm:$0xf]
  %v325 = vld [vmem:[%s2 + $0x8c] sm:$0xf]
  %v362 = vunpack.c.l.b16 %v290
  %v363 = vunpack.c.l.b16 %v291
  %v364 = vunpack.c.l.b16 %v292
  %v365 = vunpack.c.l.b16 %v293
  %v366 = vunpack.c.l.b16 %v294
  %v367 = vunpack.c.l.b16 %v295
  %v368 = vunpack.c.l.b16 %v296
  %v369 = vunpack.c.l.b16 %v297
  %v370 = vunpack.c.l.b16 %v298
  %v371 = vunpack.c.l.b16 %v299
  %v372 = vunpack.c.l.b16 %v300
  %v373 = vunpack.c.l.b16 %v301
  %v374 = vunpack.c.l.b16 %v302
  %v375 = vunpack.c.l.b16 %v303
  %v376 = vunpack.c.l.b16 %v304
  %v377 = vunpack.c.l.b16 %v305
  %v378 = vunpack.c.l.b16 %v306
  %v379 = vunpack.c.l.b16 %v307
  %v380 = vunpack.c.l.b16 %v308
  %v381 = vunpack.c.l.b16 %v309
  %v382 = vunpack.c.l.b16 %v310
  %v383 = vunpack.c.l.b16 %v311
  %v384 = vunpack.c.l.b16 %v312
  %v385 = vunpack.c.l.b16 %v313
  %v386 = vunpack.c.l.b16 %v314
  %v387 = vunpack.c.l.b16 %v315
  %v388 = vunpack.c.l.b16 %v316
  %v389 = vunpack.c.l.b16 %v317
  %v390 = vunpack.c.l.b16 %v318
  %v391 = vunpack.c.l.b16 %v319
  %v392 = vunpack.c.l.b16 %v320
  %v393 = vunpack.c.l.b16 %v321
  %v394 = vunpack.c.l.b16 %v322
  %v395 = vunpack.c.l.b16 %v323
  %v396 = vunpack.c.l.b16 %v324
  %v397 = vunpack.c.l.b16 %v325
  %v398 = vpack.c.b16 %v363, %v362
  %v399 = vpack.c.b16 %v365, %v364
  %v400 = vpack.c.b16 %v367, %v366
  %v401 = vpack.c.b16 %v369, %v368
  %v402 = vpack.c.b16 %v371, %v370
  %v403 = vpack.c.b16 %v373, %v372
  %v404 = vpack.c.b16 %v375, %v374
  %v405 = vpack.c.b16 %v377, %v376
  %v406 = vpack.c.b16 %v379, %v378
  %v407 = vpack.c.b16 %v381, %v380
  %v408 = vpack.c.b16 %v383, %v382
  %v409 = vpack.c.b16 %v385, %v384
  %v410 = vpack.c.b16 %v387, %v386
  %v411 = vpack.c.b16 %v389, %v388
  %v412 = vpack.c.b16 %v391, %v390
  %v413 = vpack.c.b16 %v393, %v392
  %v414 = vpack.c.b16 %v395, %v394
  %v415 = vpack.c.b16 %v397, %v396
  %434 = vmatprep.subr.bf16.mxu0 0
  %435 = vmatpush1.bf16.msra.mxu0 %v289
  %436 = vmatprep.subr.bf16.mxu0 0
  %437 = vmatpush1.bf16.msra.mxu0 %v288
  %438 = vmatprep.subr.bf16.mxu0 0
  %439 = vmatpush1.bf16.msra.mxu0 %v287
  %440 = vmatprep.subr.bf16.mxu0 0
  %441 = vmatpush1.bf16.msra.mxu0 %v286
  %442 = vmatprep.subr.bf16.mxu0 0
  %443 = vmatpush1.bf16.msra.mxu0 %v285
  %444 = vmatprep.subr.bf16.mxu0 0
  %445 = vmatpush1.bf16.msra.mxu0 %v284
  %446 = vmatprep.subr.bf16.mxu0 0
  %447 = vmatpush1.bf16.msra.mxu0 %v283
  %448 = vmatprep.subr.bf16.mxu0 0
  %449 = vmatpush1.bf16.msra.mxu0 %v282
  %450 = vmatprep.subr.bf16.mxu0 0
  %451 = vmatpush2.bf16.msra.mxu0 0
  %452 = vmatprep.subr.bf16.mxu0 0
  %453 = vmatpush2.bf16.msra.mxu0 0
  %454 = vmatprep.subr.bf16.mxu0 0
  %455 = vmatpush2.bf16.msra.mxu0 0
  %456 = vmatprep.subr.bf16.mxu0 0
  %457 = vmatpush2.bf16.msra.mxu0 0
  %458 = vmatprep.subr.bf16.mxu0 0
  %459 = vmatpush2.bf16.msra.mxu0 0
  %460 = vmatprep.subr.bf16.mxu0 0
  %461 = vmatpush2.bf16.msra.mxu0 0
  %462 = vmatprep.subr.bf16.mxu0 0
  %463 = vmatpush2.bf16.msra.mxu0 0
  %464 = vmatprep.subr.bf16.mxu0 0
  %465 = vmatpush2.bf16.msra.mxu0 0
  %466 = vmatprep.mubr.bf16.mxu0 0
  %467 = vmatmul.mubr.bf16.gmra.mxu0 %v398
  %v468 = vpop.f32.mrf.mxu0
  %v469 = vadd.f32 0.0, %v468
  %v470 = vpop.f32.mrf.mxu0
  %v471 = vpop.f32.mrf.mxu0
  %v472 = vadd.f32 0.0, %v471
  %v473 = vpop.f32.mrf.mxu0
  %474 = vmatprep.mubr.bf16.mxu0 0
  %475 = vmatmul.mubr.bf16.gmra.mxu0 %v399
  %v476 = vpop.f32.mrf.mxu0
  %v477 = vadd.f32 0.0, %v476
  %v478 = vpop.f32.mrf.mxu0
  %v479 = vpop.f32.mrf.mxu0
  %v480 = vadd.f32 0.0, %v479
  %v481 = vpop.f32.mrf.mxu0
  %482 = vmatprep.mubr.bf16.mxu0 0
  %483 = vmatmul.mubr.bf16.gmra.mxu0 %v400
  %v484 = vpop.f32.mrf.mxu0
  %v485 = vadd.f32 0.0, %v484
  %v486 = vpop.f32.mrf.mxu0
  %v487 = vpop.f32.mrf.mxu0
  %v488 = vadd.f32 0.0, %v487
  %v489 = vpop.f32.mrf.mxu0
  %490 = vmatprep.mubr.bf16.mxu0 0
  %491 = vmatmul.mubr.bf16.gmra.mxu0 %v401
  %v492 = vpop.f32.mrf.mxu0
  %v493 = vadd.f32 0.0, %v492
  %v494 = vpop.f32.mrf.mxu0
  %v495 = vpop.f32.mrf.mxu0
  %v496 = vadd.f32 0.0, %v495
  %v497 = vpop.f32.mrf.mxu0
  %498 = vmatprep.mubr.bf16.mxu0 0
  %499 = vmatmul.mubr.bf16.gmra.mxu0 %v402
  %v500 = vpop.f32.mrf.mxu0
  %v501 = vadd.f32 0.0, %v500
  %v502 = vpop.f32.mrf.mxu0
  %v503 = vpop.f32.mrf.mxu0
  %v504 = vadd.f32 0.0, %v503
  %v505 = vpop.f32.mrf.mxu0
  %506 = vmatprep.mubr.bf16.mxu0 0
  %507 = vmatmul.mubr.bf16.gmra.mxu0 %v403
  %v508 = vpop.f32.mrf.mxu0
  %v509 = vadd.f32 0.0, %v508
  %v510 = vpop.f32.mrf.mxu0
  %v511 = vpop.f32.mrf.mxu0
  %v512 = vadd.f32 0.0, %v511
  %v513 = vpop.f32.mrf.mxu0
  %514 = vmatprep.mubr.bf16.mxu0 0
  %515 = vmatmul.mubr.bf16.gmra.mxu0 %v404
  %v516 = vpop.f32.mrf.mxu0
  %v517 = vadd.f32 0.0, %v516
  %v518 = vpop.f32.mrf.mxu0
  %v519 = vpop.f32.mrf.mxu0
  %v520 = vadd.f32 0.0, %v519
  %v521 = vpop.f32.mrf.mxu0
  %522 = vmatprep.mubr.bf16.mxu0 0
  %523 = vmatmul.mubr.bf16.gmra.mxu0 %v405
  %v524 = vpop.f32.mrf.mxu0
  %v525 = vadd.f32 0.0, %v524
  %v526 = vpop.f32.mrf.mxu0
  %v527 = vpop.f32.mrf.mxu0
  %v528 = vadd.f32 0.0, %v527
  %v529 = vpop.f32.mrf.mxu0
  %530 = vmatprep.mubr.bf16.mxu0 0
  %531 = vmatmul.mubr.bf16.gmra.mxu0 %v406
  %v532 = vpop.f32.mrf.mxu0
  %v533 = vadd.f32 0.0, %v532
  %v534 = vpop.f32.mrf.mxu0
  %v535 = vpop.f32.mrf.mxu0
  %v536 = vadd.f32 0.0, %v535
  %v537 = vpop.f32.mrf.mxu0
  %538 = vmatprep.mubr.bf16.mxu0 0
  %539 = vmatmul.mubr.bf16.gmra.mxu0 %v407
  %v540 = vpop.f32.mrf.mxu0
  %v541 = vadd.f32 0.0, %v540
  %v542 = vpop.f32.mrf.mxu0
  %v543 = vpop.f32.mrf.mxu0
  %v544 = vadd.f32 0.0, %v543
  %v545 = vpop.f32.mrf.mxu0
  %546 = vmatprep.mubr.bf16.mxu0 0
  %547 = vmatmul.mubr.bf16.gmra.mxu0 %v408
  %v548 = vpop.f32.mrf.mxu0
  %v549 = vadd.f32 0.0, %v548
  %v550 = vpop.f32.mrf.mxu0
  %v551 = vpop.f32.mrf.mxu0
  %v552 = vadd.f32 0.0, %v551
  %v553 = vpop.f32.mrf.mxu0
  %554 = vmatprep.mubr.bf16.mxu0 0
  %555 = vmatmul.mubr.bf16.gmra.mxu0 %v409
  %v556 = vpop.f32.mrf.mxu0
  %v557 = vadd.f32 0.0, %v556
  %v558 = vpop.f32.mrf.mxu0
  %v559 = vpop.f32.mrf.mxu0
  %v560 = vadd.f32 0.0, %v559
  %v561 = vpop.f32.mrf.mxu0
  %562 = vmatprep.mubr.bf16.mxu0 0
  %563 = vmatmul.mubr.bf16.gmra.mxu0 %v410
  %v564 = vpop.f32.mrf.mxu0
  %v565 = vadd.f32 0.0, %v564
  %v566 = vpop.f32.mrf.mxu0
  %v567 = vpop.f32.mrf.mxu0
  %v568 = vadd.f32 0.0, %v567
  %v569 = vpop.f32.mrf.mxu0
  %570 = vmatprep.mubr.bf16.mxu0 0
  %571 = vmatmul.mubr.bf16.gmra.mxu0 %v411
  %v572 = vpop.f32.mrf.mxu0
  %v573 = vadd.f32 0.0, %v572
  %v574 = vpop.f32.mrf.mxu0
  %v575 = vpop.f32.mrf.mxu0
  %v576 = vadd.f32 0.0, %v575
  %v577 = vpop.f32.mrf.mxu0
  %578 = vmatprep.mubr.bf16.mxu0 0
  %579 = vmatmul.mubr.bf16.gmra.mxu0 %v412
  %v580 = vpop.f32.mrf.mxu0
  %v581 = vadd.f32 0.0, %v580
  %v582 = vpop.f32.mrf.mxu0
  %v583 = vpop.f32.mrf.mxu0
  %v584 = vadd.f32 0.0, %v583
  %v585 = vpop.f32.mrf.mxu0
  %586 = vmatprep.mubr.bf16.mxu0 0
  %587 = vmatmul.mubr.bf16.gmra.mxu0 %v413
  %v588 = vpop.f32.mrf.mxu0
  %v589 = vadd.f32 0.0, %v588
  %v590 = vpop.f32.mrf.mxu0
  %v591 = vpop.f32.mrf.mxu0
  %v592 = vadd.f32 0.0, %v591
  %v593 = vpop.f32.mrf.mxu0
  %594 = vmatprep.mubr.bf16.mxu0 0
  %595 = vmatmul.mubr.bf16.gmra.mxu0 %v414
  %v596 = vpop.f32.mrf.mxu0
  %v597 = vadd.f32 0.0, %v596
  %v598 = vpop.f32.mrf.mxu0
  %v599 = vpop.f32.mrf.mxu0
  %v600 = vadd.f32 0.0, %v599
  %v601 = vpop.f32.mrf.mxu0
  %602 = vmatprep.mubr.bf16.mxu0 0
  %603 = vmatmul.mubr.bf16.gmra.mxu0 %v415
  %v604 = vpop.f32.mrf.mxu0
  %v605 = vadd.f32 0.0, %v604
  %v606 = vpop.f32.mrf.mxu0
  %v607 = vpop.f32.mrf.mxu0
  %v608 = vadd.f32 0.0, %v607
  %v609 = vpop.f32.mrf.mxu0
  %610 = vdwg.mxu0
  %v611 = vpack.c.bf16 %v472, %v469
  %v612 = vpack.c.bf16 %v480, %v477
  %v613 = vpack.c.bf16 %v488, %v485
  %v614 = vpack.c.bf16 %v496, %v493
  %v615 = vpack.c.bf16 %v504, %v501
  %v616 = vpack.c.bf16 %v512, %v509
  %v617 = vpack.c.bf16 %v520, %v517
  %v618 = vpack.c.bf16 %v528, %v525
  %v619 = vpack.c.bf16 %v536, %v533
  %v620 = vpack.c.bf16 %v544, %v541
  %v621 = vpack.c.bf16 %v552, %v549
  %v622 = vpack.c.bf16 %v560, %v557
  %v623 = vpack.c.bf16 %v568, %v565
  %v624 = vpack.c.bf16 %v576, %v573
  %v625 = vpack.c.bf16 %v584, %v581
  %v626 = vpack.c.bf16 %v592, %v589
  %v627 = vpack.c.bf16 %v600, %v597
  %v628 = vpack.c.bf16 %v608, %v605
  %v629 = vld [vmem:[%s5] sm:$0xf]
  %v630 = vld [vmem:[%s5 + $0x4] sm:$0xf]
  %s631 = scalar_lea.vmem %s5, 8
  %v632 = vld [vmem:[%s631] sm:$0xf]
  %v633 = vld [vmem:[%s631 + $0x4] sm:$0xf]
  %v636 = vunpack.c.l.b16 %v632
  %v637 = vunpack.c.l.b16 %v633
  %v638 = vpack.c.b16 %v637, %v636
  %vm640 = vcmask 130048
  %v642 = vsel %vm640, %v613, 0
  %v645 = vsel %vm640, %v614, 0
  %647 = vmatprep.subr.bf16.mxu0 0
  %648 = vmatpush1.bf16.msra.mxu0 0
  %649 = vmatprep.subr.bf16.mxu0 0
  %650 = vmatpush1.bf16.msra.mxu0 0
  %651 = vmatprep.subr.bf16.mxu0 0
  %652 = vmatpush1.bf16.msra.mxu0 0
  %653 = vmatprep.subr.bf16.mxu0 0
  %654 = vmatpush1.bf16.msra.mxu0 0
  %655 = vmatprep.subr.bf16.mxu0 0
  %656 = vmatpush1.bf16.msra.mxu0 0
  %657 = vmatprep.subr.bf16.mxu0 0
  %658 = vmatpush1.bf16.msra.mxu0 0
  %659 = vmatprep.subr.bf16.mxu0 0
  %660 = vmatpush1.bf16.msra.mxu0 0
  %661 = vmatprep.subr.bf16.mxu0 0
  %662 = vmatpush1.bf16.msra.mxu0 %v638
  %663 = vmatprep.subr.bf16.mxu0 0
  %664 = vmatpush2.bf16.msra.mxu0 0
  %665 = vmatprep.subr.bf16.mxu0 0
  %666 = vmatpush2.bf16.msra.mxu0 0
  %667 = vmatprep.subr.bf16.mxu0 0
  %668 = vmatpush2.bf16.msra.mxu0 0
  %669 = vmatprep.subr.bf16.mxu0 0
  %670 = vmatpush2.bf16.msra.mxu0 0
  %671 = vmatprep.subr.bf16.mxu0 0
  %672 = vmatpush2.bf16.msra.mxu0 0
  %673 = vmatprep.subr.bf16.mxu0 0
  %674 = vmatpush2.bf16.msra.mxu0 0
  %675 = vmatprep.subr.bf16.mxu0 0
  %676 = vmatpush2.bf16.msra.mxu0 0
  %677 = vmatprep.subr.bf16.mxu0 0
  %678 = vmatpush2.bf16.msra.mxu0 0
  %679 = vmatprep.mubr.bf16.mxu0 0
  %680 = vmatmul.mubr.bf16.gmra.mxu0 %v642
  %v681 = vpop.f32.mrf.mxu0
  %v682 = vadd.f32 0.0, %v681
  %v683 = vpop.f32.mrf.mxu0
  %v684 = vpop.f32.mrf.mxu0
  %v685 = vadd.f32 0.0, %v684
  %v686 = vpop.f32.mrf.mxu0
  %687 = vmatprep.mubr.bf16.mxu0 0
  %688 = vmatmul.mubr.bf16.gmra.mxu0 %v645
  %v689 = vpop.f32.mrf.mxu0
  %v690 = vadd.f32 0.0, %v689
  %v691 = vpop.f32.mrf.mxu0
  %v692 = vpop.f32.mrf.mxu0
  %v693 = vadd.f32 0.0, %v692
  %v694 = vpop.f32.mrf.mxu0
  %695 = vdwg.mxu0
  %s696 = scalar_lea.vmem %s5, 16
  %v697 = vld [vmem:[%s696] sm:$0xf]
  %v698 = vld [vmem:[%s696 + $0x4] sm:$0xf]
  %s699 = scalar_lea.vmem %s5, 24
  %v700 = vld [vmem:[%s699] sm:$0xf]
  %v701 = vld [vmem:[%s699 + $0x4] sm:$0xf]
  %v704 = vunpack.c.l.b16 %v700
  %v705 = vunpack.c.l.b16 %v701
  %v706 = vpack.c.b16 %v705, %v704
  %v709 = vsel %vm640, %v617, 0
  %v712 = vsel %vm640, %v618, 0
  %714 = vmatprep.subr.bf16.mxu0 0
  %715 = vmatpush1.bf16.msra.mxu0 0
  %716 = vmatprep.subr.bf16.mxu0 0
  %717 = vmatpush1.bf16.msra.mxu0 0
  %718 = vmatprep.subr.bf16.mxu0 0
  %719 = vmatpush1.bf16.msra.mxu0 0
  %720 = vmatprep.subr.bf16.mxu0 0
  %721 = vmatpush1.bf16.msra.mxu0 0
  %722 = vmatprep.subr.bf16.mxu0 0
  %723 = vmatpush1.bf16.msra.mxu0 0
  %724 = vmatprep.subr.bf16.mxu0 0
  %725 = vmatpush1.bf16.msra.mxu0 0
  %726 = vmatprep.subr.bf16.mxu0 0
  %727 = vmatpush1.bf16.msra.mxu0 0
  %728 = vmatprep.subr.bf16.mxu0 0
  %729 = vmatpush1.bf16.msra.mxu0 %v706
  %730 = vmatprep.subr.bf16.mxu0 0
  %731 = vmatpush2.bf16.msra.mxu0 0
  %732 = vmatprep.subr.bf16.mxu0 0
  %733 = vmatpush2.bf16.msra.mxu0 0
  %734 = vmatprep.subr.bf16.mxu0 0
  %735 = vmatpush2.bf16.msra.mxu0 0
  %736 = vmatprep.subr.bf16.mxu0 0
  %737 = vmatpush2.bf16.msra.mxu0 0
  %738 = vmatprep.subr.bf16.mxu0 0
  %739 = vmatpush2.bf16.msra.mxu0 0
  %740 = vmatprep.subr.bf16.mxu0 0
  %741 = vmatpush2.bf16.msra.mxu0 0
  %742 = vmatprep.subr.bf16.mxu0 0
  %743 = vmatpush2.bf16.msra.mxu0 0
  %744 = vmatprep.subr.bf16.mxu0 0
  %745 = vmatpush2.bf16.msra.mxu0 0
  %746 = vmatprep.mubr.bf16.mxu0 0
  %747 = vmatmul.mubr.bf16.gmra.mxu0 %v709
  %v748 = vpop.f32.mrf.mxu0
  %v749 = vadd.f32 0.0, %v748
  %v750 = vpop.f32.mrf.mxu0
  %v751 = vpop.f32.mrf.mxu0
  %v752 = vadd.f32 0.0, %v751
  %v753 = vpop.f32.mrf.mxu0
  %754 = vmatprep.mubr.bf16.mxu0 0
  %755 = vmatmul.mubr.bf16.gmra.mxu0 %v712
  %v756 = vpop.f32.mrf.mxu0
  %v757 = vadd.f32 0.0, %v756
  %v758 = vpop.f32.mrf.mxu0
  %v759 = vpop.f32.mrf.mxu0
  %v760 = vadd.f32 0.0, %v759
  %v761 = vpop.f32.mrf.mxu0
  %762 = vdwg.mxu0
  %s763 = scalar_lea.vmem %s5, 32
  %v764 = vld [vmem:[%s763] sm:$0xf]
  %v765 = vld [vmem:[%s763 + $0x4] sm:$0xf]
  %s766 = scalar_lea.vmem %s5, 40
  %v767 = vld [vmem:[%s766] sm:$0xf]
  %v768 = vld [vmem:[%s766 + $0x4] sm:$0xf]
  %v771 = vunpack.c.l.b16 %v767
  %v772 = vunpack.c.l.b16 %v768
  %v773 = vpack.c.b16 %v772, %v771
  %v776 = vsel %vm640, %v621, 0
  %v779 = vsel %vm640, %v622, 0
  %781 = vmatprep.subr.bf16.mxu0 0
  %782 = vmatpush1.bf16.msra.mxu0 0
  %783 = vmatprep.subr.bf16.mxu0 0
  %784 = vmatpush1.bf16.msra.mxu0 0
  %785 = vmatprep.subr.bf16.mxu0 0
  %786 = vmatpush1.bf16.msra.mxu0 0
  %787 = vmatprep.subr.bf16.mxu0 0
  %788 = vmatpush1.bf16.msra.mxu0 0
  %789 = vmatprep.subr.bf16.mxu0 0
  %790 = vmatpush1.bf16.msra.mxu0 0
  %791 = vmatprep.subr.bf16.mxu0 0
  %792 = vmatpush1.bf16.msra.mxu0 0
  %793 = vmatprep.subr.bf16.mxu0 0
  %794 = vmatpush1.bf16.msra.mxu0 0
  %795 = vmatprep.subr.bf16.mxu0 0
  %796 = vmatpush1.bf16.msra.mxu0 %v773
  %797 = vmatprep.subr.bf16.mxu0 0
  %798 = vmatpush2.bf16.msra.mxu0 0
  %799 = vmatprep.subr.bf16.mxu0 0
  %800 = vmatpush2.bf16.msra.mxu0 0
  %801 = vmatprep.subr.bf16.mxu0 0
  %802 = vmatpush2.bf16.msra.mxu0 0
  %803 = vmatprep.subr.bf16.mxu0 0
  %804 = vmatpush2.bf16.msra.mxu0 0
  %805 = vmatprep.subr.bf16.mxu0 0
  %806 = vmatpush2.bf16.msra.mxu0 0
  %807 = vmatprep.subr.bf16.mxu0 0
  %808 = vmatpush2.bf16.msra.mxu0 0
  %809 = vmatprep.subr.bf16.mxu0 0
  %810 = vmatpush2.bf16.msra.mxu0 0
  %811 = vmatprep.subr.bf16.mxu0 0
  %812 = vmatpush2.bf16.msra.mxu0 0
  %813 = vmatprep.mubr.bf16.mxu0 0
  %814 = vmatmul.mubr.bf16.gmra.mxu0 %v776
  %v815 = vpop.f32.mrf.mxu0
  %v816 = vadd.f32 0.0, %v815
  %v817 = vpop.f32.mrf.mxu0
  %v818 = vpop.f32.mrf.mxu0
  %v819 = vadd.f32 0.0, %v818
  %v820 = vpop.f32.mrf.mxu0
  %821 = vmatprep.mubr.bf16.mxu0 0
  %822 = vmatmul.mubr.bf16.gmra.mxu0 %v779
  %v823 = vpop.f32.mrf.mxu0
  %v824 = vadd.f32 0.0, %v823
  %v825 = vpop.f32.mrf.mxu0
  %v826 = vpop.f32.mrf.mxu0
  %v827 = vadd.f32 0.0, %v826
  %v828 = vpop.f32.mrf.mxu0
  %829 = vdwg.mxu0
  %s830 = scalar_lea.vmem %s5, 48
  %v831 = vld [vmem:[%s830] sm:$0xf]
  %v832 = vld [vmem:[%s830 + $0x4] sm:$0xf]
  %s833 = scalar_lea.vmem %s5, 56
  %v834 = vld [vmem:[%s833] sm:$0xf]
  %v835 = vld [vmem:[%s833 + $0x4] sm:$0xf]
  %v838 = vunpack.c.l.b16 %v834
  %v839 = vunpack.c.l.b16 %v835
  %v840 = vpack.c.b16 %v839, %v838
  %v843 = vsel %vm640, %v625, 0
  %v846 = vsel %vm640, %v626, 0
  %848 = vmatprep.subr.bf16.mxu0 0
  %849 = vmatpush1.bf16.msra.mxu0 0
  %850 = vmatprep.subr.bf16.mxu0 0
  %851 = vmatpush1.bf16.msra.mxu0 0
  %852 = vmatprep.subr.bf16.mxu0 0
  %853 = vmatpush1.bf16.msra.mxu0 0
  %854 = vmatprep.subr.bf16.mxu0 0
  %855 = vmatpush1.bf16.msra.mxu0 0
  %856 = vmatprep.subr.bf16.mxu0 0
  %857 = vmatpush1.bf16.msra.mxu0 0
  %858 = vmatprep.subr.bf16.mxu0 0
  %859 = vmatpush1.bf16.msra.mxu0 0
  %860 = vmatprep.subr.bf16.mxu0 0
  %861 = vmatpush1.bf16.msra.mxu0 0
  %862 = vmatprep.subr.bf16.mxu0 0
  %863 = vmatpush1.bf16.msra.mxu0 %v840
  %864 = vmatprep.subr.bf16.mxu0 0
  %865 = vmatpush2.bf16.msra.mxu0 0
  %866 = vmatprep.subr.bf16.mxu0 0
  %867 = vmatpush2.bf16.msra.mxu0 0
  %868 = vmatprep.subr.bf16.mxu0 0
  %869 = vmatpush2.bf16.msra.mxu0 0
  %870 = vmatprep.subr.bf16.mxu0 0
  %871 = vmatpush2.bf16.msra.mxu0 0
  %872 = vmatprep.subr.bf16.mxu0 0
  %873 = vmatpush2.bf16.msra.mxu0 0
  %874 = vmatprep.subr.bf16.mxu0 0
  %875 = vmatpush2.bf16.msra.mxu0 0
  %876 = vmatprep.subr.bf16.mxu0 0
  %877 = vmatpush2.bf16.msra.mxu0 0
  %878 = vmatprep.subr.bf16.mxu0 0
  %879 = vmatpush2.bf16.msra.mxu0 0
  %880 = vmatprep.mubr.bf16.mxu0 0
  %881 = vmatmul.mubr.bf16.gmra.mxu0 %v843
  %v882 = vpop.f32.mrf.mxu0
  %v883 = vadd.f32 0.0, %v882
  %v884 = vpop.f32.mrf.mxu0
  %v885 = vpop.f32.mrf.mxu0
  %v886 = vadd.f32 0.0, %v885
  %v887 = vpop.f32.mrf.mxu0
  %888 = vmatprep.mubr.bf16.mxu0 0
  %889 = vmatmul.mubr.bf16.gmra.mxu0 %v846
  %v890 = vpop.f32.mrf.mxu0
  %v891 = vadd.f32 0.0, %v890
  %v892 = vpop.f32.mrf.mxu0
  %v893 = vpop.f32.mrf.mxu0
  %v894 = vadd.f32 0.0, %v893
  %v895 = vpop.f32.mrf.mxu0
  %896 = vdwg.mxu0
  %s897 = scalar_lea.vmem %s5, 64
  %v898 = vld [vmem:[%s897] sm:$0xf]
  %v899 = vld [vmem:[%s897 + $0x4] sm:$0xf]
  %v902 = vunpack.c.l.b16 %v898
  %v903 = vunpack.c.l.b16 %v899
  %v904 = vpack.c.b16 %v903, %v902
  %v907 = vsel %vm640, %v627, 0
  %v910 = vsel %vm640, %v628, 0
  %912 = vmatprep.subr.bf16.mxu0 0
  %913 = vmatpush1.bf16.msra.mxu0 0
  %914 = vmatprep.subr.bf16.mxu0 0
  %915 = vmatpush1.bf16.msra.mxu0 0
  %916 = vmatprep.subr.bf16.mxu0 0
  %917 = vmatpush1.bf16.msra.mxu0 0
  %918 = vmatprep.subr.bf16.mxu0 0
  %919 = vmatpush1.bf16.msra.mxu0 0
  %920 = vmatprep.subr.bf16.mxu0 0
  %921 = vmatpush1.bf16.msra.mxu0 0
  %922 = vmatprep.subr.bf16.mxu0 0
  %923 = vmatpush1.bf16.msra.mxu0 0
  %924 = vmatprep.subr.bf16.mxu0 0
  %925 = vmatpush1.bf16.msra.mxu0 0
  %926 = vmatprep.subr.bf16.mxu0 0
  %927 = vmatpush1.bf16.msra.mxu0 %v904
  %928 = vmatprep.subr.bf16.mxu0 0
  %929 = vmatpush2.bf16.msra.mxu0 0
  %930 = vmatprep.subr.bf16.mxu0 0
  %931 = vmatpush2.bf16.msra.mxu0 0
  %932 = vmatprep.subr.bf16.mxu0 0
  %933 = vmatpush2.bf16.msra.mxu0 0
  %934 = vmatprep.subr.bf16.mxu0 0
  %935 = vmatpush2.bf16.msra.mxu0 0
  %936 = vmatprep.subr.bf16.mxu0 0
  %937 = vmatpush2.bf16.msra.mxu0 0
  %938 = vmatprep.subr.bf16.mxu0 0
  %939 = vmatpush2.bf16.msra.mxu0 0
  %940 = vmatprep.subr.bf16.mxu0 0
  %941 = vmatpush2.bf16.msra.mxu0 0
  %942 = vmatprep.subr.bf16.mxu0 0
  %943 = vmatpush2.bf16.msra.mxu0 0
  %944 = vmatprep.mubr.bf16.mxu0 0
  %945 = vmatmul.mubr.bf16.gmra.mxu0 %v907
  %v946 = vpop.f32.mrf.mxu0
  %v947 = vadd.f32 0.0, %v946
  %v948 = vpop.f32.mrf.mxu0
  %v949 = vpop.f32.mrf.mxu0
  %v950 = vadd.f32 0.0, %v949
  %v951 = vpop.f32.mrf.mxu0
  %952 = vmatprep.mubr.bf16.mxu0 0
  %953 = vmatmul.mubr.bf16.gmra.mxu0 %v910
  %v954 = vpop.f32.mrf.mxu0
  %v955 = vadd.f32 0.0, %v954
  %v956 = vpop.f32.mrf.mxu0
  %v957 = vpop.f32.mrf.mxu0
  %v958 = vadd.f32 0.0, %v957
  %v959 = vpop.f32.mrf.mxu0
  %960 = vdwg.mxu0
  %v963 = vunpack.c.l.b16 %v629
  %v964 = vunpack.c.l.b16 %v630
  %v965 = vpack.c.b16 %v964, %v963
  %v968 = vsel %vm640, %v611, 0
  %v971 = vsel %vm640, %v612, 0
  %973 = vmatprep.subr.bf16.mxu0 0
  %974 = vmatpush1.bf16.msra.mxu0 0
  %975 = vmatprep.subr.bf16.mxu0 0
  %976 = vmatpush1.bf16.msra.mxu0 0
  %977 = vmatprep.subr.bf16.mxu0 0
  %978 = vmatpush1.bf16.msra.mxu0 0
  %979 = vmatprep.subr.bf16.mxu0 0
  %980 = vmatpush1.bf16.msra.mxu0 0
  %981 = vmatprep.subr.bf16.mxu0 0
  %982 = vmatpush1.bf16.msra.mxu0 0
  %983 = vmatprep.subr.bf16.mxu0 0
  %984 = vmatpush1.bf16.msra.mxu0 0
  %985 = vmatprep.subr.bf16.mxu0 0
  %986 = vmatpush1.bf16.msra.mxu0 0
  %987 = vmatprep.subr.bf16.mxu0 0
  %988 = vmatpush1.bf16.msra.mxu0 %v965
  %989 = vmatprep.subr.bf16.mxu0 0
  %990 = vmatpush2.bf16.msra.mxu0 0
  %991 = vmatprep.subr.bf16.mxu0 0
  %992 = vmatpush2.bf16.msra.mxu0 0
  %993 = vmatprep.subr.bf16.mxu0 0
  %994 = vmatpush2.bf16.msra.mxu0 0
  %995 = vmatprep.subr.bf16.mxu0 0
  %996 = vmatpush2.bf16.msra.mxu0 0
  %997 = vmatprep.subr.bf16.mxu0 0
  %998 = vmatpush2.bf16.msra.mxu0 0
  %999 = vmatprep.subr.bf16.mxu0 0
  %1000 = vmatpush2.bf16.msra.mxu0 0
  %1001 = vmatprep.subr.bf16.mxu0 0
  %1002 = vmatpush2.bf16.msra.mxu0 0
  %1003 = vmatprep.subr.bf16.mxu0 0
  %1004 = vmatpush2.bf16.msra.mxu0 0
  %1005 = vmatprep.mubr.bf16.mxu0 0
  %1006 = vmatmul.mubr.bf16.gmra.mxu0 %v968
  %v1007 = vpop.f32.mrf.mxu0
  %v1008 = vadd.f32 %v682, %v1007
  %v1009 = vpop.f32.mrf.mxu0
  %v1010 = vpop.f32.mrf.mxu0
  %v1011 = vadd.f32 %v685, %v1010
  %v1012 = vpop.f32.mrf.mxu0
  %1013 = vmatprep.mubr.bf16.mxu0 0
  %1014 = vmatmul.mubr.bf16.gmra.mxu0 %v971
  %v1015 = vpop.f32.mrf.mxu0
  %v1016 = vadd.f32 %v690, %v1015
  %v1017 = vpop.f32.mrf.mxu0
  %v1018 = vpop.f32.mrf.mxu0
  %v1019 = vadd.f32 %v693, %v1018
  %v1020 = vpop.f32.mrf.mxu0
  %1021 = vdwg.mxu0
  %v1024 = vunpack.c.l.b16 %v697
  %v1025 = vunpack.c.l.b16 %v698
  %v1026 = vpack.c.b16 %v1025, %v1024
  %v1029 = vsel %vm640, %v615, 0
  %v1032 = vsel %vm640, %v616, 0
  %1034 = vmatprep.subr.bf16.mxu0 0
  %1035 = vmatpush1.bf16.msra.mxu0 0
  %1036 = vmatprep.subr.bf16.mxu0 0
  %1037 = vmatpush1.bf16.msra.mxu0 0
  %1038 = vmatprep.subr.bf16.mxu0 0
  %1039 = vmatpush1.bf16.msra.mxu0 0
  %1040 = vmatprep.subr.bf16.mxu0 0
  %1041 = vmatpush1.bf16.msra.mxu0 0
  %1042 = vmatprep.subr.bf16.mxu0 0
  %1043 = vmatpush1.bf16.msra.mxu0 0
  %1044 = vmatprep.subr.bf16.mxu0 0
  %1045 = vmatpush1.bf16.msra.mxu0 0
  %1046 = vmatprep.subr.bf16.mxu0 0
  %1047 = vmatpush1.bf16.msra.mxu0 0
  %1048 = vmatprep.subr.bf16.mxu0 0
  %1049 = vmatpush1.bf16.msra.mxu0 %v1026
  %1050 = vmatprep.subr.bf16.mxu0 0
  %1051 = vmatpush2.bf16.msra.mxu0 0
  %1052 = vmatprep.subr.bf16.mxu0 0
  %1053 = vmatpush2.bf16.msra.mxu0 0
  %1054 = vmatprep.subr.bf16.mxu0 0
  %1055 = vmatpush2.bf16.msra.mxu0 0
  %1056 = vmatprep.subr.bf16.mxu0 0
  %1057 = vmatpush2.bf16.msra.mxu0 0
  %1058 = vmatprep.subr.bf16.mxu0 0
  %1059 = vmatpush2.bf16.msra.mxu0 0
  %1060 = vmatprep.subr.bf16.mxu0 0
  %1061 = vmatpush2.bf16.msra.mxu0 0
  %1062 = vmatprep.subr.bf16.mxu0 0
  %1063 = vmatpush2.bf16.msra.mxu0 0
  %1064 = vmatprep.subr.bf16.mxu0 0
  %1065 = vmatpush2.bf16.msra.mxu0 0
  %1066 = vmatprep.mubr.bf16.mxu0 0
  %1067 = vmatmul.mubr.bf16.gmra.mxu0 %v1029
  %v1068 = vpop.f32.mrf.mxu0
  %v1069 = vadd.f32 %v749, %v1068
  %v1070 = vpop.f32.mrf.mxu0
  %v1071 = vpop.f32.mrf.mxu0
  %v1072 = vadd.f32 %v752, %v1071
  %v1073 = vpop.f32.mrf.mxu0
  %1074 = vmatprep.mubr.bf16.mxu0 0
  %1075 = vmatmul.mubr.bf16.gmra.mxu0 %v1032
  %v1076 = vpop.f32.mrf.mxu0
  %v1077 = vadd.f32 %v757, %v1076
  %v1078 = vpop.f32.mrf.mxu0
  %v1079 = vpop.f32.mrf.mxu0
  %v1080 = vadd.f32 %v760, %v1079
  %v1081 = vpop.f32.mrf.mxu0
  %1082 = vdwg.mxu0
  %v1085 = vunpack.c.l.b16 %v764
  %v1086 = vunpack.c.l.b16 %v765
  %v1087 = vpack.c.b16 %v1086, %v1085
  %v1090 = vsel %vm640, %v619, 0
  %v1093 = vsel %vm640, %v620, 0
  %1095 = vmatprep.subr.bf16.mxu0 0
  %1096 = vmatpush1.bf16.msra.mxu0 0
  %1097 = vmatprep.subr.bf16.mxu0 0
  %1098 = vmatpush1.bf16.msra.mxu0 0
  %1099 = vmatprep.subr.bf16.mxu0 0
  %1100 = vmatpush1.bf16.msra.mxu0 0
  %1101 = vmatprep.subr.bf16.mxu0 0
  %1102 = vmatpush1.bf16.msra.mxu0 0
  %1103 = vmatprep.subr.bf16.mxu0 0
  %1104 = vmatpush1.bf16.msra.mxu0 0
  %1105 = vmatprep.subr.bf16.mxu0 0
  %1106 = vmatpush1.bf16.msra.mxu0 0
  %1107 = vmatprep.subr.bf16.mxu0 0
  %1108 = vmatpush1.bf16.msra.mxu0 0
  %1109 = vmatprep.subr.bf16.mxu0 0
  %1110 = vmatpush1.bf16.msra.mxu0 %v1087
  %1111 = vmatprep.subr.bf16.mxu0 0
  %1112 = vmatpush2.bf16.msra.mxu0 0
  %1113 = vmatprep.subr.bf16.mxu0 0
  %1114 = vmatpush2.bf16.msra.mxu0 0
  %1115 = vmatprep.subr.bf16.mxu0 0
  %1116 = vmatpush2.bf16.msra.mxu0 0
  %1117 = vmatprep.subr.bf16.mxu0 0
  %1118 = vmatpush2.bf16.msra.mxu0 0
  %1119 = vmatprep.subr.bf16.mxu0 0
  %1120 = vmatpush2.bf16.msra.mxu0 0
  %1121 = vmatprep.subr.bf16.mxu0 0
  %1122 = vmatpush2.bf16.msra.mxu0 0
  %1123 = vmatprep.subr.bf16.mxu0 0
  %1124 = vmatpush2.bf16.msra.mxu0 0
  %1125 = vmatprep.subr.bf16.mxu0 0
  %1126 = vmatpush2.bf16.msra.mxu0 0
  %1127 = vmatprep.mubr.bf16.mxu0 0
  %1128 = vmatmul.mubr.bf16.gmra.mxu0 %v1090
  %v1129 = vpop.f32.mrf.mxu0
  %v1130 = vadd.f32 %v816, %v1129
  %v1131 = vpop.f32.mrf.mxu0
  %v1132 = vpop.f32.mrf.mxu0
  %v1133 = vadd.f32 %v819, %v1132
  %v1134 = vpop.f32.mrf.mxu0
  %1135 = vmatprep.mubr.bf16.mxu0 0
  %1136 = vmatmul.mubr.bf16.gmra.mxu0 %v1093
  %v1137 = vpop.f32.mrf.mxu0
  %v1138 = vadd.f32 %v824, %v1137
  %v1139 = vpop.f32.mrf.mxu0
  %v1140 = vpop.f32.mrf.mxu0
  %v1141 = vadd.f32 %v827, %v1140
  %v1142 = vpop.f32.mrf.mxu0
  %1143 = vdwg.mxu0
  %v1146 = vunpack.c.l.b16 %v831
  %v1147 = vunpack.c.l.b16 %v832
  %v1148 = vpack.c.b16 %v1147, %v1146
  %v1151 = vsel %vm640, %v623, 0
  %v1154 = vsel %vm640, %v624, 0
  %1156 = vmatprep.subr.bf16.mxu0 0
  %1157 = vmatpush1.bf16.msra.mxu0 0
  %1158 = vmatprep.subr.bf16.mxu0 0
  %1159 = vmatpush1.bf16.msra.mxu0 0
  %1160 = vmatprep.subr.bf16.mxu0 0
  %1161 = vmatpush1.bf16.msra.mxu0 0
  %1162 = vmatprep.subr.bf16.mxu0 0
  %1163 = vmatpush1.bf16.msra.mxu0 0
  %1164 = vmatprep.subr.bf16.mxu0 0
  %1165 = vmatpush1.bf16.msra.mxu0 0
  %1166 = vmatprep.subr.bf16.mxu0 0
  %1167 = vmatpush1.bf16.msra.mxu0 0
  %1168 = vmatprep.subr.bf16.mxu0 0
  %1169 = vmatpush1.bf16.msra.mxu0 0
  %1170 = vmatprep.subr.bf16.mxu0 0
  %1171 = vmatpush1.bf16.msra.mxu0 %v1148
  %1172 = vmatprep.subr.bf16.mxu0 0
  %1173 = vmatpush2.bf16.msra.mxu0 0
  %1174 = vmatprep.subr.bf16.mxu0 0
  %1175 = vmatpush2.bf16.msra.mxu0 0
  %1176 = vmatprep.subr.bf16.mxu0 0
  %1177 = vmatpush2.bf16.msra.mxu0 0
  %1178 = vmatprep.subr.bf16.mxu0 0
  %1179 = vmatpush2.bf16.msra.mxu0 0
  %1180 = vmatprep.subr.bf16.mxu0 0
  %1181 = vmatpush2.bf16.msra.mxu0 0
  %1182 = vmatprep.subr.bf16.mxu0 0
  %1183 = vmatpush2.bf16.msra.mxu0 0
  %1184 = vmatprep.subr.bf16.mxu0 0
  %1185 = vmatpush2.bf16.msra.mxu0 0
  %1186 = vmatprep.subr.bf16.mxu0 0
  %1187 = vmatpush2.bf16.msra.mxu0 0
  %1188 = vmatprep.mubr.bf16.mxu0 0
  %1189 = vmatmul.mubr.bf16.gmra.mxu0 %v1151
  %v1190 = vpop.f32.mrf.mxu0
  %v1191 = vadd.f32 %v883, %v1190
  %v1192 = vpop.f32.mrf.mxu0
  %v1193 = vpop.f32.mrf.mxu0
  %v1194 = vadd.f32 %v886, %v1193
  %v1195 = vpop.f32.mrf.mxu0
  %1196 = vmatprep.mubr.bf16.mxu0 0
  %1197 = vmatmul.mubr.bf16.gmra.mxu0 %v1154
  %v1198 = vpop.f32.mrf.mxu0
  %v1199 = vadd.f32 %v891, %v1198
  %v1200 = vpop.f32.mrf.mxu0
  %v1201 = vpop.f32.mrf.mxu0
  %v1202 = vadd.f32 %v894, %v1201
  %v1203 = vpop.f32.mrf.mxu0
  %1204 = vdwg.mxu0
  %v1205 = vadd.f32 %v1008, %v1069
  %v1206 = vadd.f32 %v1011, %v1072
  %v1207 = vadd.f32 %v1016, %v1077
  %v1208 = vadd.f32 %v1019, %v1080
  %v1209 = vadd.f32 %v1130, %v1191
  %v1210 = vadd.f32 %v1133, %v1194
  %v1211 = vadd.f32 %v1138, %v1199
  %v1212 = vadd.f32 %v1141, %v1202
  %v1213 = vadd.f32 %v1205, %v1209
  %v1214 = vadd.f32 %v1206, %v1210
  %v1215 = vadd.f32 %v1207, %v1211
  %v1216 = vadd.f32 %v1208, %v1212
  %v1217 = vadd.f32 %v1213, %v947
  %v1218 = vadd.f32 %v1214, %v950
  %v1219 = vadd.f32 %v1215, %v955
  %v1220 = vadd.f32 %v1216, %v958
  %v1221 = vld [vmem:[%s6] sm:$0x1]
  %v1223 = vlaneseq
  %v1224 = vshrl.u32 %v1223, 7
  %v1225 = vsub.s32 0, %v1224
  %v1226 = vrot.slane %v1221, %v1225
  %v1228 = vadd.f32 %v1217, %v1226
  %v1229 = vadd.f32 %v1218, %v1226
  %v1230 = vadd.f32 %v1219, %v1226
  %v1231 = vadd.f32 %v1220, %v1226
  %v1232 = vmax.f32 %v1228, 0.0
  %v1233 = vmax.f32 %v1229, 0.0
  %v1234 = vmax.f32 %v1230, 0.0
  %v1235 = vmax.f32 %v1231, 0.0
  %v1237 = vrot.slane %v1232, 2
  %1238 = vrot.lane.b32.xlu0 %v1237, 16
  %v1239 = vpop.permute.xlu0 %1238
  %v1241 = vrot.slane %v1232, 4
  %1242 = vrot.lane.b32.xlu0 %v1241, 32
  %v1243 = vpop.permute.xlu0 %1242
  %v1245 = vrot.slane %v1232, 6
  %1246 = vrot.lane.b32.xlu0 %v1245, 48
  %v1247 = vpop.permute.xlu0 %1246
  %1250 = vrot.lane.b32.xlu0 %v1233, 64
  %v1251 = vpop.permute.xlu0 %1250
  %v1253 = vrot.slane %v1233, 2
  %1254 = vrot.lane.b32.xlu0 %v1253, 80
  %v1255 = vpop.permute.xlu0 %1254
  %v1257 = vrot.slane %v1233, 4
  %1258 = vrot.lane.b32.xlu0 %v1257, 96
  %v1259 = vpop.permute.xlu0 %1258
  %v1261 = vrot.slane %v1233, 6
  %1262 = vrot.lane.b32.xlu0 %v1261, 112
  %v1263 = vpop.permute.xlu0 %1262
  %v1266 = vrot.slane %v1234, 2
  %1267 = vrot.lane.b32.xlu0 %v1266, 16
  %v1268 = vpop.permute.xlu0 %1267
  %v1270 = vrot.slane %v1234, 4
  %1271 = vrot.lane.b32.xlu0 %v1270, 32
  %v1272 = vpop.permute.xlu0 %1271
  %v1274 = vrot.slane %v1234, 6
  %1275 = vrot.lane.b32.xlu0 %v1274, 48
  %v1276 = vpop.permute.xlu0 %1275
  %1279 = vrot.lane.b32.xlu0 %v1235, 64
  %v1280 = vpop.permute.xlu0 %1279
  %v1282 = vrot.slane %v1235, 2
  %1283 = vrot.lane.b32.xlu0 %v1282, 80
  %v1284 = vpop.permute.xlu0 %1283
  %v1286 = vrot.slane %v1235, 4
  %1287 = vrot.lane.b32.xlu0 %v1286, 96
  %v1288 = vpop.permute.xlu0 %1287
  %v1290 = vrot.slane %v1235, 6
  %1291 = vrot.lane.b32.xlu0 %v1290, 112
  %v1292 = vpop.permute.xlu0 %1291
  %v1294 = vsel %vm640, %v1232, %v1239
  %vm1295 = vcmask 261120
  %v1296 = vsel %vm1295, %v1294, %v1243
  %vm1297 = vcmask 392192
  %v1298 = vsel %vm1297, %v1296, %v1247
  %vm1299 = vcmask 523264
  %v1300 = vsel %vm1299, %v1298, %v1251
  %vm1301 = vcmask 654336
  %v1302 = vsel %vm1301, %v1300, %v1255
  %vm1303 = vcmask 785408
  %v1304 = vsel %vm1303, %v1302, %v1259
  %vm1305 = vcmask 916480
  %v1306 = vsel %vm1305, %v1304, %v1263
  %v1307 = vsel %vm640, %v1234, %v1268
  %v1308 = vsel %vm1295, %v1307, %v1272
  %v1309 = vsel %vm1297, %v1308, %v1276
  %v1310 = vsel %vm1299, %v1309, %v1280
  %v1311 = vsel %vm1301, %v1310, %v1284
  %v1312 = vsel %vm1303, %v1311, %v1288
  %v1313 = vsel %vm1305, %v1312, %v1292
  %1314 = vrot.lane.b32.xlu0 %v1232, 112
  %v1315 = vpop.permute.xlu0 %1314
  %1318 = vrot.lane.b32.xlu0 %v1241, 16
  %v1319 = vpop.permute.xlu0 %1318
  %1321 = vrot.lane.b32.xlu0 %v1245, 32
  %v1322 = vpop.permute.xlu0 %1321
  %1324 = vrot.lane.b32.xlu0 %v1233, 48
  %v1325 = vpop.permute.xlu0 %1324
  %1327 = vrot.lane.b32.xlu0 %v1253, 64
  %v1328 = vpop.permute.xlu0 %1327
  %1330 = vrot.lane.b32.xlu0 %v1257, 80
  %v1331 = vpop.permute.xlu0 %1330
  %1333 = vrot.lane.b32.xlu0 %v1261, 96
  %v1334 = vpop.permute.xlu0 %1333
  %1336 = vrot.lane.b32.xlu0 %v1234, 112
  %v1337 = vpop.permute.xlu0 %1336
  %1340 = vrot.lane.b32.xlu0 %v1270, 16
  %v1341 = vpop.permute.xlu0 %1340
  %1343 = vrot.lane.b32.xlu0 %v1274, 32
  %v1344 = vpop.permute.xlu0 %1343
  %1346 = vrot.lane.b32.xlu0 %v1235, 48
  %v1347 = vpop.permute.xlu0 %1346
  %1349 = vrot.lane.b32.xlu0 %v1282, 64
  %v1350 = vpop.permute.xlu0 %1349
  %1352 = vrot.lane.b32.xlu0 %v1286, 80
  %v1353 = vpop.permute.xlu0 %1352
  %1355 = vrot.lane.b32.xlu0 %v1290, 96
  %v1356 = vpop.permute.xlu0 %1355
  %v1358 = vsel %vm640, %v1315, %v1237
  %v1359 = vsel %vm1295, %v1358, %v1319
  %v1360 = vsel %vm1297, %v1359, %v1322
  %v1361 = vsel %vm1299, %v1360, %v1325
  %v1362 = vsel %vm1301, %v1361, %v1328
  %v1363 = vsel %vm1303, %v1362, %v1331
  %v1364 = vsel %vm1305, %v1363, %v1334
  %v1365 = vsel %vm640, %v1337, %v1266
  %v1366 = vsel %vm1295, %v1365, %v1341
  %v1367 = vsel %vm1297, %v1366, %v1344
  %v1368 = vsel %vm1299, %v1367, %v1347
  %v1369 = vsel %vm1301, %v1368, %v1350
  %v1370 = vsel %vm1303, %v1369, %v1353
  %v1371 = vsel %vm1305, %v1370, %v1356
  %v1372 = vld [vmem:[%s7] sm:$0xff]
  %v1373 = vld [vmem:[%s7 + $0x8] sm:$0xff]
  %v1374 = vld [vmem:[%s7 + $0x10] sm:$0xff]
  %v1375 = vld [vmem:[%s7 + $0x18] sm:$0xff]
  %v1376 = vld [vmem:[%s7 + $0x20] sm:$0xff]
  %v1377 = vld [vmem:[%s7 + $0x28] sm:$0xff]
  %v1378 = vld [vmem:[%s7 + $0x30] sm:$0xff]
  %v1379 = vld [vmem:[%s7 + $0x38] sm:$0xff]
  %v1380 = vld [vmem:[%s7 + $0x40] sm:$0xff]
  %v1381 = vld [vmem:[%s7 + $0x48] sm:$0xff]
  %v1382 = vld [vmem:[%s7 + $0x50] sm:$0xff]
  %v1383 = vld [vmem:[%s7 + $0x58] sm:$0xff]
  %v1384 = vld [vmem:[%s7 + $0x60] sm:$0xff]
  %v1385 = vld [vmem:[%s7 + $0x68] sm:$0xff]
  %v1386 = vld [vmem:[%s7 + $0x70] sm:$0xff]
  %v1387 = vld [vmem:[%s7 + $0x78] sm:$0xff]
  %v1388 = vld [vmem:[%s7 + $0x80] sm:$0xff]
  %v1389 = vld [vmem:[%s7 + $0x88] sm:$0xff]
  %v1390 = vld [vmem:[%s7 + $0x90] sm:$0xff]
  %v1391 = vld [vmem:[%s7 + $0x98] sm:$0xff]
  %v1392 = vld [vmem:[%s7 + $0xa0] sm:$0xff]
  %v1393 = vld [vmem:[%s7 + $0xa8] sm:$0xff]
  %v1394 = vld [vmem:[%s7 + $0xb0] sm:$0xff]
  %v1395 = vld [vmem:[%s7 + $0xb8] sm:$0xff]
  %v1396 = vld [vmem:[%s7 + $0xc0] sm:$0xff]
  %v1397 = vld [vmem:[%s7 + $0xc8] sm:$0xff]
  %v1398 = vld [vmem:[%s7 + $0xd0] sm:$0xff]
  %v1399 = vld [vmem:[%s7 + $0xd8] sm:$0xff]
  %v1400 = vld [vmem:[%s7 + $0xe0] sm:$0xff]
  %v1401 = vld [vmem:[%s7 + $0xe8] sm:$0xff]
  %v1402 = vld [vmem:[%s7 + $0xf0] sm:$0xff]
  %v1403 = vld [vmem:[%s7 + $0xf8] sm:$0xff]
  %v1404 = vld [vmem:[%s7 + $0x100] sm:$0xff]
  %v1405 = vld [vmem:[%s7 + $0x108] sm:$0xff]
  %v1406 = vld [vmem:[%s7 + $0x110] sm:$0xff]
  %v1407 = vld [vmem:[%s7 + $0x118] sm:$0xff]
  %v1408 = vld [vmem:[%s7 + $0x120] sm:$0xff]
  %v1409 = vld [vmem:[%s7 + $0x128] sm:$0xff]
  %v1410 = vld [vmem:[%s7 + $0x130] sm:$0xff]
  %v1411 = vld [vmem:[%s7 + $0x138] sm:$0xff]
  %v1412 = vld [vmem:[%s7 + $0x140] sm:$0xff]
  %v1413 = vld [vmem:[%s7 + $0x148] sm:$0xff]
  %v1414 = vld [vmem:[%s7 + $0x150] sm:$0xff]
  %v1415 = vld [vmem:[%s7 + $0x158] sm:$0xff]
  %v1416 = vld [vmem:[%s7 + $0x160] sm:$0xff]
  %v1417 = vld [vmem:[%s7 + $0x168] sm:$0xff]
  %v1418 = vld [vmem:[%s7 + $0x170] sm:$0xff]
  %v1419 = vld [vmem:[%s7 + $0x178] sm:$0xff]
  %v1420 = vld [vmem:[%s7 + $0x180] sm:$0xff]
  %v1421 = vld [vmem:[%s7 + $0x188] sm:$0xff]
  %v1422 = vld [vmem:[%s7 + $0x190] sm:$0xff]
  %v1423 = vld [vmem:[%s7 + $0x198] sm:$0xff]
  %v1424 = vld [vmem:[%s7 + $0x1a0] sm:$0xff]
  %v1425 = vld [vmem:[%s7 + $0x1a8] sm:$0xff]
  %v1426 = vld [vmem:[%s7 + $0x1b0] sm:$0xff]
  %v1427 = vld [vmem:[%s7 + $0x1b8] sm:$0xff]
  %v1428 = vld [vmem:[%s7 + $0x1c0] sm:$0xff]
  %v1429 = vld [vmem:[%s7 + $0x1c8] sm:$0xff]
  %v1430 = vld [vmem:[%s7 + $0x1d0] sm:$0xff]
  %v1431 = vld [vmem:[%s7 + $0x1d8] sm:$0xff]
  %v1432 = vld [vmem:[%s7 + $0x1e0] sm:$0xff]
  %v1433 = vld [vmem:[%s7 + $0x1e8] sm:$0xff]
  %v1434 = vld [vmem:[%s7 + $0x1f0] sm:$0xff]
  %v1435 = vld [vmem:[%s7 + $0x1f8] sm:$0xff]
  %v1436 = vld [vmem:[%s8] sm:$0x1]
  %v1438 = vlaneseq
  %v1439 = vshrl.u32 %v1438, 7
  %v1440 = vsub.s32 0, %v1439
  %v1441 = vrot.slane %v1436, %v1440
  %1443 = vmatprep.subr.mxu0 0.0
  %1444 = vmatpush1.msra.mxu0 %v1387
  %1445 = vmatprep.subr.mxu0 0.0
  %1446 = vmatpush1.msra.mxu0 %v1386
  %1447 = vmatprep.subr.mxu0 0.0
  %1448 = vmatpush1.msra.mxu0 %v1385
  %1449 = vmatprep.subr.mxu0 0.0
  %1450 = vmatpush1.msra.mxu0 %v1384
  %1451 = vmatprep.subr.mxu0 0.0
  %1452 = vmatpush1.msra.mxu0 %v1383
  %1453 = vmatprep.subr.mxu0 0.0
  %1454 = vmatpush1.msra.mxu0 %v1382
  %1455 = vmatprep.subr.mxu0 0.0
  %1456 = vmatpush1.msra.mxu0 %v1381
  %1457 = vmatprep.subr.mxu0 0.0
  %1458 = vmatpush1.msra.mxu0 %v1380
  %1459 = vmatprep.subr.mxu0 0.0
  %1460 = vmatpush1.msra.mxu0 %v1379
  %1461 = vmatprep.subr.mxu0 0.0
  %1462 = vmatpush1.msra.mxu0 %v1378
  %1463 = vmatprep.subr.mxu0 0.0
  %1464 = vmatpush1.msra.mxu0 %v1377
  %1465 = vmatprep.subr.mxu0 0.0
  %1466 = vmatpush1.msra.mxu0 %v1376
  %1467 = vmatprep.subr.mxu0 0.0
  %1468 = vmatpush1.msra.mxu0 %v1375
  %1469 = vmatprep.subr.mxu0 0.0
  %1470 = vmatpush1.msra.mxu0 %v1374
  %1471 = vmatprep.subr.mxu0 0.0
  %1472 = vmatpush1.msra.mxu0 %v1373
  %1473 = vmatprep.subr.mxu0 0.0
  %1474 = vmatpush1.msra.mxu0 %v1372
  %1475 = vmatprep.subr.mxu0 0.0
  %1476 = vmatpush2.msra.mxu0 %v1403
  %1477 = vmatprep.subr.mxu0 0.0
  %1478 = vmatpush2.msra.mxu0 %v1402
  %1479 = vmatprep.subr.mxu0 0.0
  %1480 = vmatpush2.msra.mxu0 %v1401
  %1481 = vmatprep.subr.mxu0 0.0
  %1482 = vmatpush2.msra.mxu0 %v1400
  %1483 = vmatprep.subr.mxu0 0.0
  %1484 = vmatpush2.msra.mxu0 %v1399
  %1485 = vmatprep.subr.mxu0 0.0
  %1486 = vmatpush2.msra.mxu0 %v1398
  %1487 = vmatprep.subr.mxu0 0.0
  %1488 = vmatpush2.msra.mxu0 %v1397
  %1489 = vmatprep.subr.mxu0 0.0
  %1490 = vmatpush2.msra.mxu0 %v1396
  %1491 = vmatprep.subr.mxu0 0.0
  %1492 = vmatpush2.msra.mxu0 %v1395
  %1493 = vmatprep.subr.mxu0 0.0
  %1494 = vmatpush2.msra.mxu0 %v1394
  %1495 = vmatprep.subr.mxu0 0.0
  %1496 = vmatpush2.msra.mxu0 %v1393
  %1497 = vmatprep.subr.mxu0 0.0
  %1498 = vmatpush2.msra.mxu0 %v1392
  %1499 = vmatprep.subr.mxu0 0.0
  %1500 = vmatpush2.msra.mxu0 %v1391
  %1501 = vmatprep.subr.mxu0 0.0
  %1502 = vmatpush2.msra.mxu0 %v1390
  %1503 = vmatprep.subr.mxu0 0.0
  %1504 = vmatpush2.msra.mxu0 %v1389
  %1505 = vmatprep.subr.mxu0 0.0
  %1506 = vmatpush2.msra.mxu0 %v1388
  %1507 = vmatprep.mubr.f32.mxu0 %v1313
  %1508 = vmatmul.mubr.f32.gmra.mxu0 %v1306
  %v1509 = vpop.f32.mrf.mxu0
  %v1510 = vadd.f32 %v1441, %v1509
  %v1511 = vpop.f32.mrf.mxu0
  %1512 = vdwg.mxu0
  %1513 = vmatprep.subr.mxu0 0.0
  %1514 = vmatpush1.msra.mxu0 %v1419
  %1515 = vmatprep.subr.mxu0 0.0
  %1516 = vmatpush1.msra.mxu0 %v1418
  %1517 = vmatprep.subr.mxu0 0.0
  %1518 = vmatpush1.msra.mxu0 %v1417
  %1519 = vmatprep.subr.mxu0 0.0
  %1520 = vmatpush1.msra.mxu0 %v1416
  %1521 = vmatprep.subr.mxu0 0.0
  %1522 = vmatpush1.msra.mxu0 %v1415
  %1523 = vmatprep.subr.mxu0 0.0
  %1524 = vmatpush1.msra.mxu0 %v1414
  %1525 = vmatprep.subr.mxu0 0.0
  %1526 = vmatpush1.msra.mxu0 %v1413
  %1527 = vmatprep.subr.mxu0 0.0
  %1528 = vmatpush1.msra.mxu0 %v1412
  %1529 = vmatprep.subr.mxu0 0.0
  %1530 = vmatpush1.msra.mxu0 %v1411
  %1531 = vmatprep.subr.mxu0 0.0
  %1532 = vmatpush1.msra.mxu0 %v1410
  %1533 = vmatprep.subr.mxu0 0.0
  %1534 = vmatpush1.msra.mxu0 %v1409
  %1535 = vmatprep.subr.mxu0 0.0
  %1536 = vmatpush1.msra.mxu0 %v1408
  %1537 = vmatprep.subr.mxu0 0.0
  %1538 = vmatpush1.msra.mxu0 %v1407
  %1539 = vmatprep.subr.mxu0 0.0
  %1540 = vmatpush1.msra.mxu0 %v1406
  %1541 = vmatprep.subr.mxu0 0.0
  %1542 = vmatpush1.msra.mxu0 %v1405
  %1543 = vmatprep.subr.mxu0 0.0
  %1544 = vmatpush1.msra.mxu0 %v1404
  %1545 = vmatprep.subr.mxu0 0.0
  %1546 = vmatpush2.msra.mxu0 %v1435
  %1547 = vmatprep.subr.mxu0 0.0
  %1548 = vmatpush2.msra.mxu0 %v1434
  %1549 = vmatprep.subr.mxu0 0.0
  %1550 = vmatpush2.msra.mxu0 %v1433
  %1551 = vmatprep.subr.mxu0 0.0
  %1552 = vmatpush2.msra.mxu0 %v1432
  %1553 = vmatprep.subr.mxu0 0.0
  %1554 = vmatpush2.msra.mxu0 %v1431
  %1555 = vmatprep.subr.mxu0 0.0
  %1556 = vmatpush2.msra.mxu0 %v1430
  %1557 = vmatprep.subr.mxu0 0.0
  %1558 = vmatpush2.msra.mxu0 %v1429
  %1559 = vmatprep.subr.mxu0 0.0
  %1560 = vmatpush2.msra.mxu0 %v1428
  %1561 = vmatprep.subr.mxu0 0.0
  %1562 = vmatpush2.msra.mxu0 %v1427
  %1563 = vmatprep.subr.mxu0 0.0
  %1564 = vmatpush2.msra.mxu0 %v1426
  %1565 = vmatprep.subr.mxu0 0.0
  %1566 = vmatpush2.msra.mxu0 %v1425
  %1567 = vmatprep.subr.mxu0 0.0
  %1568 = vmatpush2.msra.mxu0 %v1424
  %1569 = vmatprep.subr.mxu0 0.0
  %1570 = vmatpush2.msra.mxu0 %v1423
  %1571 = vmatprep.subr.mxu0 0.0
  %1572 = vmatpush2.msra.mxu0 %v1422
  %1573 = vmatprep.subr.mxu0 0.0
  %1574 = vmatpush2.msra.mxu0 %v1421
  %1575 = vmatprep.subr.mxu0 0.0
  %1576 = vmatpush2.msra.mxu0 %v1420
  %1577 = vmatprep.mubr.f32.mxu0 %v1371
  %1578 = vmatmul.mubr.f32.gmra.mxu0 %v1364
  %v1579 = vpop.f32.mrf.mxu0
  %v1580 = vadd.f32 %v1510, %v1579
  %v1581 = vpop.f32.mrf.mxu0
  %1582 = vdwg.mxu0
  %v1583 = vld [vmem:[%s1] sm:$0x3]
  %v1584 = vmul.f32 %v1580, 0.5
  %v1585 = vmul.f32 %v1584, 1.442695
  %v1586 = vpow.pop %v1585
  %1588 = vrot.lane.b32.xlu0 %v1586, 64
  %v1589 = vpop.permute.xlu0 %1588
  %v1591 = vmul.f32 %v1583, %v1589
  %v1592 = vadd.f32 %v1580, %v1591
  %v1593 = vsel %vm1299, %v1592, 0.0
  %v1596 = vcombine.low %v1580, %v1593
  %v1598 = vunpack.c.l.s4 1983009808
  %v1599 = vunpack.c.0.s8 %v1598
  %v1600 = vlaneseq
  %v1601 = vshrl.u32 %v1600, 7
  %v1602 = vsub.s32 %v1599, %v1601
  %v1603 = vrot.slane %v1596, %v1602
  %1605 = vst [vmem:[%s11] sm:$0xf] %v1603
  %v1606 = vpack.c.bf16 %v1592, %v1592
  %v1607 = vld [vmem:[%s9] sm:$0xff]
  %v1608 = vld [vmem:[%s9 + $0x8] sm:$0xff]
  %v1609 = vld [vmem:[%s9 + $0x10] sm:$0xff]
  %v1610 = vld [vmem:[%s9 + $0x18] sm:$0xff]
  %v1611 = vld [vmem:[%s9 + $0x20] sm:$0xff]
  %v1612 = vld [vmem:[%s9 + $0x28] sm:$0xff]
  %v1613 = vld [vmem:[%s9 + $0x30] sm:$0xff]
  %v1614 = vld [vmem:[%s9 + $0x38] sm:$0xff]
  %v1615 = vld [vmem:[%s9 + $0x40] sm:$0xff]
  %v1616 = vld [vmem:[%s9 + $0x48] sm:$0xff]
  %v1617 = vld [vmem:[%s9 + $0x50] sm:$0xff]
  %v1618 = vld [vmem:[%s9 + $0x58] sm:$0xff]
  %v1619 = vld [vmem:[%s9 + $0x60] sm:$0xff]
  %v1620 = vld [vmem:[%s9 + $0x68] sm:$0xff]
  %v1621 = vld [vmem:[%s9 + $0x70] sm:$0xff]
  %v1622 = vld [vmem:[%s9 + $0x78] sm:$0xff]
  %v1623 = vld [vmem:[%s9 + $0x80] sm:$0xff]
  %v1624 = vld [vmem:[%s9 + $0x88] sm:$0xff]
  %v1625 = vld [vmem:[%s9 + $0x90] sm:$0xff]
  %v1626 = vld [vmem:[%s9 + $0x98] sm:$0xff]
  %v1627 = vld [vmem:[%s9 + $0xa0] sm:$0xff]
  %v1628 = vld [vmem:[%s9 + $0xa8] sm:$0xff]
  %v1629 = vld [vmem:[%s9 + $0xb0] sm:$0xff]
  %v1630 = vld [vmem:[%s9 + $0xb8] sm:$0xff]
  %v1631 = vld [vmem:[%s9 + $0xc0] sm:$0xff]
  %v1632 = vld [vmem:[%s9 + $0xc8] sm:$0xff]
  %v1633 = vld [vmem:[%s9 + $0xd0] sm:$0xff]
  %v1634 = vld [vmem:[%s9 + $0xd8] sm:$0xff]
  %v1635 = vld [vmem:[%s9 + $0xe0] sm:$0xff]
  %v1636 = vld [vmem:[%s9 + $0xe8] sm:$0xff]
  %v1637 = vld [vmem:[%s9 + $0xf0] sm:$0xff]
  %v1638 = vld [vmem:[%s9 + $0xf8] sm:$0xff]
  %v1639 = vld [vmem:[%s9 + $0x100] sm:$0xff]
  %v1640 = vld [vmem:[%s9 + $0x108] sm:$0xff]
  %v1641 = vld [vmem:[%s9 + $0x110] sm:$0xff]
  %v1642 = vld [vmem:[%s9 + $0x118] sm:$0xff]
  %v1643 = vld [vmem:[%s9 + $0x120] sm:$0xff]
  %v1644 = vld [vmem:[%s9 + $0x128] sm:$0xff]
  %v1645 = vld [vmem:[%s9 + $0x130] sm:$0xff]
  %v1646 = vld [vmem:[%s9 + $0x138] sm:$0xff]
  %v1647 = vld [vmem:[%s9 + $0x140] sm:$0xff]
  %v1648 = vld [vmem:[%s9 + $0x148] sm:$0xff]
  %v1649 = vld [vmem:[%s9 + $0x150] sm:$0xff]
  %v1650 = vld [vmem:[%s9 + $0x158] sm:$0xff]
  %v1651 = vld [vmem:[%s9 + $0x160] sm:$0xff]
  %v1652 = vld [vmem:[%s9 + $0x168] sm:$0xff]
  %v1653 = vld [vmem:[%s9 + $0x170] sm:$0xff]
  %v1654 = vld [vmem:[%s9 + $0x178] sm:$0xff]
  %v1655 = vld [vmem:[%s9 + $0x180] sm:$0xff]
  %v1656 = vld [vmem:[%s9 + $0x188] sm:$0xff]
  %v1657 = vld [vmem:[%s9 + $0x190] sm:$0xff]
  %v1658 = vld [vmem:[%s9 + $0x198] sm:$0xff]
  %v1659 = vld [vmem:[%s9 + $0x1a0] sm:$0xff]
  %v1660 = vld [vmem:[%s9 + $0x1a8] sm:$0xff]
  %v1661 = vld [vmem:[%s9 + $0x1b0] sm:$0xff]
  %v1662 = vld [vmem:[%s9 + $0x1b8] sm:$0xff]
  %v1663 = vld [vmem:[%s9 + $0x1c0] sm:$0xff]
  %v1664 = vld [vmem:[%s9 + $0x1c8] sm:$0xff]
  %v1665 = vld [vmem:[%s9 + $0x1d0] sm:$0xff]
  %v1666 = vld [vmem:[%s9 + $0x1d8] sm:$0xff]
  %v1667 = vld [vmem:[%s9 + $0x1e0] sm:$0xff]
  %v1668 = vld [vmem:[%s9 + $0x1e8] sm:$0xff]
  %v1669 = vld [vmem:[%s9 + $0x1f0] sm:$0xff]
  %v1670 = vld [vmem:[%s9 + $0x1f8] sm:$0xff]
  %v1671 = vld [vmem:[%s9 + $0x200] sm:$0xff]
  %v1672 = vld [vmem:[%s9 + $0x208] sm:$0xff]
  %v1673 = vld [vmem:[%s9 + $0x210] sm:$0xff]
  %v1674 = vld [vmem:[%s9 + $0x218] sm:$0xff]
  %v1675 = vld [vmem:[%s9 + $0x220] sm:$0xff]
  %v1676 = vld [vmem:[%s9 + $0x228] sm:$0xff]
  %v1677 = vld [vmem:[%s9 + $0x230] sm:$0xff]
  %v1678 = vld [vmem:[%s9 + $0x238] sm:$0xff]
  %v1679 = vld [vmem:[%s10] sm:$0xff]
  %v1680 = vld [vmem:[%s10 + $0x8] sm:$0xff]
  %v1681 = vld [vmem:[%s10 + $0x10] sm:$0x3]
  %v1685 = vlaneseq
  %v1686 = vshrl.u32 %v1685, 7
  %v1687 = vsub.s32 0, %v1686
  %v1688 = vrot.slane %v1679, %v1687
  %v1689 = vlaneseq
  %v1690 = vshrl.u32 %v1689, 7
  %v1691 = vsub.s32 1, %v1690
  %v1692 = vrot.slane %v1679, %v1691
  %v1693 = vlaneseq
  %v1694 = vshrl.u32 %v1693, 7
  %v1695 = vsub.s32 2, %v1694
  %v1696 = vrot.slane %v1679, %v1695
  %v1697 = vlaneseq
  %v1698 = vshrl.u32 %v1697, 7
  %v1699 = vsub.s32 3, %v1698
  %v1700 = vrot.slane %v1679, %v1699
  %v1701 = vlaneseq
  %v1702 = vshrl.u32 %v1701, 7
  %v1703 = vsub.s32 4, %v1702
  %v1704 = vrot.slane %v1679, %v1703
  %v1705 = vlaneseq
  %v1706 = vshrl.u32 %v1705, 7
  %v1707 = vsub.s32 5, %v1706
  %v1708 = vrot.slane %v1679, %v1707
  %v1709 = vlaneseq
  %v1710 = vshrl.u32 %v1709, 7
  %v1711 = vsub.s32 6, %v1710
  %v1712 = vrot.slane %v1679, %v1711
  %v1713 = vlaneseq
  %v1714 = vshrl.u32 %v1713, 7
  %v1715 = vsub.s32 7, %v1714
  %v1716 = vrot.slane %v1679, %v1715
  %v1717 = vlaneseq
  %v1718 = vshrl.u32 %v1717, 7
  %v1719 = vsub.s32 0, %v1718
  %v1720 = vrot.slane %v1680, %v1719
  %v1721 = vlaneseq
  %v1722 = vshrl.u32 %v1721, 7
  %v1723 = vsub.s32 1, %v1722
  %v1724 = vrot.slane %v1680, %v1723
  %v1725 = vlaneseq
  %v1726 = vshrl.u32 %v1725, 7
  %v1727 = vsub.s32 2, %v1726
  %v1728 = vrot.slane %v1680, %v1727
  %v1729 = vlaneseq
  %v1730 = vshrl.u32 %v1729, 7
  %v1731 = vsub.s32 3, %v1730
  %v1732 = vrot.slane %v1680, %v1731
  %v1733 = vlaneseq
  %v1734 = vshrl.u32 %v1733, 7
  %v1735 = vsub.s32 4, %v1734
  %v1736 = vrot.slane %v1680, %v1735
  %v1737 = vlaneseq
  %v1738 = vshrl.u32 %v1737, 7
  %v1739 = vsub.s32 5, %v1738
  %v1740 = vrot.slane %v1680, %v1739
  %v1741 = vlaneseq
  %v1742 = vshrl.u32 %v1741, 7
  %v1743 = vsub.s32 6, %v1742
  %v1744 = vrot.slane %v1680, %v1743
  %v1745 = vlaneseq
  %v1746 = vshrl.u32 %v1745, 7
  %v1747 = vsub.s32 7, %v1746
  %v1748 = vrot.slane %v1680, %v1747
  %v1749 = vlaneseq
  %v1750 = vshrl.u32 %v1749, 7
  %v1751 = vsub.s32 0, %v1750
  %v1752 = vrot.slane %v1681, %v1751
  %v1753 = vlaneseq
  %v1754 = vshrl.u32 %v1753, 7
  %v1755 = vsub.s32 1, %v1754
  %v1756 = vrot.slane %v1681, %v1755
  %v1847 = vunpack.c.l.b16 %v1607
  %v1848 = vunpack.c.h.b16 %v1607
  %v1849 = vunpack.c.l.b16 %v1608
  %v1850 = vunpack.c.h.b16 %v1608
  %v1851 = vunpack.c.l.b16 %v1609
  %v1852 = vunpack.c.h.b16 %v1609
  %v1853 = vunpack.c.l.b16 %v1610
  %v1854 = vunpack.c.h.b16 %v1610
  %v1855 = vunpack.c.l.b16 %v1611
  %v1856 = vunpack.c.h.b16 %v1611
  %v1857 = vunpack.c.l.b16 %v1612
  %v1858 = vunpack.c.h.b16 %v1612
  %v1859 = vunpack.c.l.b16 %v1613
  %v1860 = vunpack.c.h.b16 %v1613
  %v1861 = vunpack.c.l.b16 %v1614
  %v1862 = vunpack.c.h.b16 %v1614
  %v1863 = vunpack.c.l.b16 %v1615
  %v1864 = vunpack.c.h.b16 %v1615
  %v1865 = vunpack.c.l.b16 %v1616
  %v1866 = vunpack.c.h.b16 %v1616
  %v1867 = vunpack.c.l.b16 %v1617
  %v1868 = vunpack.c.h.b16 %v1617
  %v1869 = vunpack.c.l.b16 %v1618
  %v1870 = vunpack.c.h.b16 %v1618
  %v1871 = vunpack.c.l.b16 %v1619
  %v1872 = vunpack.c.h.b16 %v1619
  %v1873 = vunpack.c.l.b16 %v1620
  %v1874 = vunpack.c.h.b16 %v1620
  %v1875 = vunpack.c.l.b16 %v1621
  %v1876 = vunpack.c.h.b16 %v1621
  %v1877 = vunpack.c.l.b16 %v1622
  %v1878 = vunpack.c.h.b16 %v1622
  %v1879 = vunpack.c.l.b16 %v1623
  %v1880 = vunpack.c.h.b16 %v1623
  %v1881 = vunpack.c.l.b16 %v1624
  %v1882 = vunpack.c.h.b16 %v1624
  %v1883 = vunpack.c.l.b16 %v1625
  %v1884 = vunpack.c.h.b16 %v1625
  %v1885 = vunpack.c.l.b16 %v1626
  %v1886 = vunpack.c.h.b16 %v1626
  %v1887 = vunpack.c.l.b16 %v1627
  %v1888 = vunpack.c.h.b16 %v1627
  %v1889 = vunpack.c.l.b16 %v1628
  %v1890 = vunpack.c.h.b16 %v1628
  %v1891 = vunpack.c.l.b16 %v1629
  %v1892 = vunpack.c.h.b16 %v1629
  %v1893 = vunpack.c.l.b16 %v1630
  %v1894 = vunpack.c.h.b16 %v1630
  %v1895 = vunpack.c.l.b16 %v1631
  %v1896 = vunpack.c.h.b16 %v1631
  %v1897 = vunpack.c.l.b16 %v1632
  %v1898 = vunpack.c.h.b16 %v1632
  %v1899 = vunpack.c.l.b16 %v1633
  %v1900 = vunpack.c.h.b16 %v1633
  %v1901 = vunpack.c.l.b16 %v1634
  %v1902 = vunpack.c.h.b16 %v1634
  %v1903 = vunpack.c.l.b16 %v1635
  %v1904 = vunpack.c.h.b16 %v1635
  %v1905 = vunpack.c.l.b16 %v1636
  %v1906 = vunpack.c.h.b16 %v1636
  %v1907 = vunpack.c.l.b16 %v1637
  %v1908 = vunpack.c.h.b16 %v1637
  %v1909 = vunpack.c.l.b16 %v1638
  %v1910 = vunpack.c.h.b16 %v1638
  %v1911 = vunpack.c.l.b16 %v1639
  %v1912 = vunpack.c.h.b16 %v1639
  %v1913 = vunpack.c.l.b16 %v1640
  %v1914 = vunpack.c.h.b16 %v1640
  %v1915 = vunpack.c.l.b16 %v1641
  %v1916 = vunpack.c.h.b16 %v1641
  %v1917 = vunpack.c.l.b16 %v1642
  %v1918 = vunpack.c.h.b16 %v1642
  %v1919 = vunpack.c.l.b16 %v1643
  %v1920 = vunpack.c.h.b16 %v1643
  %v1921 = vunpack.c.l.b16 %v1644
  %v1922 = vunpack.c.h.b16 %v1644
  %v1923 = vunpack.c.l.b16 %v1645
  %v1924 = vunpack.c.h.b16 %v1645
  %v1925 = vunpack.c.l.b16 %v1646
  %v1926 = vunpack.c.h.b16 %v1646
  %v1927 = vunpack.c.l.b16 %v1647
  %v1928 = vunpack.c.h.b16 %v1647
  %v1929 = vunpack.c.l.b16 %v1648
  %v1930 = vunpack.c.h.b16 %v1648
  %v1931 = vunpack.c.l.b16 %v1649
  %v1932 = vunpack.c.h.b16 %v1649
  %v1933 = vunpack.c.l.b16 %v1650
  %v1934 = vunpack.c.h.b16 %v1650
  %v1935 = vunpack.c.l.b16 %v1651
  %v1936 = vunpack.c.h.b16 %v1651
  %v1937 = vunpack.c.l.b16 %v1652
  %v1938 = vunpack.c.h.b16 %v1652
  %v1939 = vunpack.c.l.b16 %v1653
  %v1940 = vunpack.c.h.b16 %v1653
  %v1941 = vunpack.c.l.b16 %v1654
  %v1942 = vunpack.c.h.b16 %v1654
  %v1943 = vunpack.c.l.b16 %v1655
  %v1944 = vunpack.c.h.b16 %v1655
  %v1945 = vunpack.c.l.b16 %v1656
  %v1946 = vunpack.c.h.b16 %v1656
  %v1947 = vunpack.c.l.b16 %v1657
  %v1948 = vunpack.c.h.b16 %v1657
  %v1949 = vunpack.c.l.b16 %v1658
  %v1950 = vunpack.c.h.b16 %v1658
  %v1951 = vunpack.c.l.b16 %v1659
  %v1952 = vunpack.c.h.b16 %v1659
  %v1953 = vunpack.c.l.b16 %v1660
  %v1954 = vunpack.c.h.b16 %v1660
  %v1955 = vunpack.c.l.b16 %v1661
  %v1956 = vunpack.c.h.b16 %v1661
  %v1957 = vunpack.c.l.b16 %v1662
  %v1958 = vunpack.c.h.b16 %v1662
  %v1959 = vunpack.c.l.b16 %v1663
  %v1960 = vunpack.c.h.b16 %v1663
  %v1961 = vunpack.c.l.b16 %v1664
  %v1962 = vunpack.c.h.b16 %v1664
  %v1963 = vunpack.c.l.b16 %v1665
  %v1964 = vunpack.c.h.b16 %v1665
  %v1965 = vunpack.c.l.b16 %v1666
  %v1966 = vunpack.c.h.b16 %v1666
  %v1967 = vunpack.c.l.b16 %v1667
  %v1968 = vunpack.c.h.b16 %v1667
  %v1969 = vunpack.c.l.b16 %v1668
  %v1970 = vunpack.c.h.b16 %v1668
  %v1971 = vunpack.c.l.b16 %v1669
  %v1972 = vunpack.c.h.b16 %v1669
  %v1973 = vunpack.c.l.b16 %v1670
  %v1974 = vunpack.c.h.b16 %v1670
  %v1975 = vunpack.c.l.b16 %v1671
  %v1976 = vunpack.c.h.b16 %v1671
  %v1977 = vunpack.c.l.b16 %v1672
  %v1978 = vunpack.c.h.b16 %v1672
  %v1979 = vunpack.c.l.b16 %v1673
  %v1980 = vunpack.c.h.b16 %v1673
  %v1981 = vunpack.c.l.b16 %v1674
  %v1982 = vunpack.c.h.b16 %v1674
  %v1983 = vunpack.c.l.b16 %v1675
  %v1984 = vunpack.c.h.b16 %v1675
  %v1985 = vunpack.c.l.b16 %v1676
  %v1986 = vunpack.c.h.b16 %v1676
  %v1987 = vunpack.c.l.b16 %v1677
  %v1988 = vunpack.c.h.b16 %v1677
  %v1989 = vunpack.c.l.b16 %v1678
  %v1990 = vunpack.c.h.b16 %v1678
  %v1991 = vpack.c.b16 %v1865, %v1847
  %v1992 = vpack.c.b16 %v1866, %v1848
  %v1993 = vpack.c.b16 %v1867, %v1849
  %v1994 = vpack.c.b16 %v1868, %v1850
  %v1995 = vpack.c.b16 %v1869, %v1851
  %v1996 = vpack.c.b16 %v1870, %v1852
  %v1997 = vpack.c.b16 %v1871, %v1853
  %v1998 = vpack.c.b16 %v1872, %v1854
  %v1999 = vpack.c.b16 %v1873, %v1855
  %v2000 = vpack.c.b16 %v1874, %v1856
  %v2001 = vpack.c.b16 %v1875, %v1857
  %v2002 = vpack.c.b16 %v1876, %v1858
  %v2003 = vpack.c.b16 %v1877, %v1859
  %v2004 = vpack.c.b16 %v1878, %v1860
  %v2005 = vpack.c.b16 %v1879, %v1861
  %v2006 = vpack.c.b16 %v1880, %v1862
  %v2007 = vpack.c.b16 %v1881, %v1863
  %v2008 = vpack.c.b16 %v1882, %v1864
  %v2009 = vpack.c.b16 %v1901, %v1883
  %v2010 = vpack.c.b16 %v1902, %v1884
  %v2011 = vpack.c.b16 %v1903, %v1885
  %v2012 = vpack.c.b16 %v1904, %v1886
  %v2013 = vpack.c.b16 %v1905, %v1887
  %v2014 = vpack.c.b16 %v1906, %v1888
  %v2015 = vpack.c.b16 %v1907, %v1889
  %v2016 = vpack.c.b16 %v1908, %v1890
  %v2017 = vpack.c.b16 %v1909, %v1891
  %v2018 = vpack.c.b16 %v1910, %v1892
  %v2019 = vpack.c.b16 %v1911, %v1893
  %v2020 = vpack.c.b16 %v1912, %v1894
  %v2021 = vpack.c.b16 %v1913, %v1895
  %v2022 = vpack.c.b16 %v1914, %v1896
  %v2023 = vpack.c.b16 %v1915, %v1897
  %v2024 = vpack.c.b16 %v1916, %v1898
  %v2025 = vpack.c.b16 %v1917, %v1899
  %v2026 = vpack.c.b16 %v1918, %v1900
  %v2027 = vpack.c.b16 %v1937, %v1919
  %v2028 = vpack.c.b16 %v1938, %v1920
  %v2029 = vpack.c.b16 %v1939, %v1921
  %v2030 = vpack.c.b16 %v1940, %v1922
  %v2031 = vpack.c.b16 %v1941, %v1923
  %v2032 = vpack.c.b16 %v1942, %v1924
  %v2033 = vpack.c.b16 %v1943, %v1925
  %v2034 = vpack.c.b16 %v1944, %v1926
  %v2035 = vpack.c.b16 %v1945, %v1927
  %v2036 = vpack.c.b16 %v1946, %v1928
  %v2037 = vpack.c.b16 %v1947, %v1929
  %v2038 = vpack.c.b16 %v1948, %v1930
  %v2039 = vpack.c.b16 %v1949, %v1931
  %v2040 = vpack.c.b16 %v1950, %v1932
  %v2041 = vpack.c.b16 %v1951, %v1933
  %v2042 = vpack.c.b16 %v1952, %v1934
  %v2043 = vpack.c.b16 %v1953, %v1935
  %v2044 = vpack.c.b16 %v1954, %v1936
  %v2045 = vpack.c.b16 %v1973, %v1955
  %v2046 = vpack.c.b16 %v1974, %v1956
  %v2047 = vpack.c.b16 %v1975, %v1957
  %v2048 = vpack.c.b16 %v1976, %v1958
  %v2049 = vpack.c.b16 %v1977, %v1959
  %v2050 = vpack.c.b16 %v1978, %v1960
  %v2051 = vpack.c.b16 %v1979, %v1961
  %v2052 = vpack.c.b16 %v1980, %v1962
  %v2053 = vpack.c.b16 %v1981, %v1963
  %v2054 = vpack.c.b16 %v1982, %v1964
  %v2055 = vpack.c.b16 %v1983, %v1965
  %v2056 = vpack.c.b16 %v1984, %v1966
  %v2057 = vpack.c.b16 %v1985, %v1967
  %v2058 = vpack.c.b16 %v1986, %v1968
  %v2059 = vpack.c.b16 %v1987, %v1969
  %v2060 = vpack.c.b16 %v1988, %v1970
  %v2061 = vpack.c.b16 %v1989, %v1971
  %v2062 = vpack.c.b16 %v1990, %v1972
  %v2136 = vsel %vm1299, %v1606, 0
  %2138 = vmatprep.subr.bf16.mxu0 0
  %2139 = vmatpush1.bf16.msra.mxu0 0
  %2140 = vmatprep.subr.bf16.mxu0 0
  %2141 = vmatpush1.bf16.msra.mxu0 0
  %2142 = vmatprep.subr.bf16.mxu0 0
  %2143 = vmatpush1.bf16.msra.mxu0 0
  %2144 = vmatprep.subr.bf16.mxu0 0
  %2145 = vmatpush1.bf16.msra.mxu0 0
  %2146 = vmatprep.subr.bf16.mxu0 %v2046
  %2147 = vmatpush1.bf16.msra.mxu0 %v2045
  %2148 = vmatprep.subr.bf16.mxu0 %v2028
  %2149 = vmatpush1.bf16.msra.mxu0 %v2027
  %2150 = vmatprep.subr.bf16.mxu0 %v2010
  %2151 = vmatpush1.bf16.msra.mxu0 %v2009
  %2152 = vmatprep.subr.bf16.mxu0 %v1992
  %2153 = vmatpush1.bf16.msra.mxu0 %v1991
  %2154 = vmatprep.subr.bf16.mxu0 0
  %2155 = vmatpush2.bf16.msra.mxu0 0
  %2156 = vmatprep.subr.bf16.mxu0 0
  %2157 = vmatpush2.bf16.msra.mxu0 0
  %2158 = vmatprep.subr.bf16.mxu0 0
  %2159 = vmatpush2.bf16.msra.mxu0 0
  %2160 = vmatprep.subr.bf16.mxu0 0
  %2161 = vmatpush2.bf16.msra.mxu0 0
  %2162 = vmatprep.subr.bf16.mxu0 0
  %2163 = vmatpush2.bf16.msra.mxu0 0
  %2164 = vmatprep.subr.bf16.mxu0 0
  %2165 = vmatpush2.bf16.msra.mxu0 0
  %2166 = vmatprep.subr.bf16.mxu0 0
  %2167 = vmatpush2.bf16.msra.mxu0 0
  %2168 = vmatprep.subr.bf16.mxu0 0
  %2169 = vmatpush2.bf16.msra.mxu0 0
  %2170 = vmatprep.mubr.bf16.mxu0 0
  %2171 = vmatmul.mubr.bf16.gmra.mxu0 %v2136
  %v2172 = vpop.f32.mrf.mxu0
  %v2173 = vadd.f32 %v1688, %v2172
  %v2174 = vpop.f32.mrf.mxu0
  %v2175 = vadd.f32 %v1692, %v2174
  %v2176 = vpop.f32.mrf.mxu0
  %v2177 = vpop.f32.mrf.mxu0
  %2178 = vdwg.mxu0
  %2179 = vmatprep.subr.bf16.mxu0 0
  %2180 = vmatpush1.bf16.msra.mxu0 0
  %2181 = vmatprep.subr.bf16.mxu0 0
  %2182 = vmatpush1.bf16.msra.mxu0 0
  %2183 = vmatprep.subr.bf16.mxu0 0
  %2184 = vmatpush1.bf16.msra.mxu0 0
  %2185 = vmatprep.subr.bf16.mxu0 0
  %2186 = vmatpush1.bf16.msra.mxu0 0
  %2187 = vmatprep.subr.bf16.mxu0 %v2048
  %2188 = vmatpush1.bf16.msra.mxu0 %v2047
  %2189 = vmatprep.subr.bf16.mxu0 %v2030
  %2190 = vmatpush1.bf16.msra.mxu0 %v2029
  %2191 = vmatprep.subr.bf16.mxu0 %v2012
  %2192 = vmatpush1.bf16.msra.mxu0 %v2011
  %2193 = vmatprep.subr.bf16.mxu0 %v1994
  %2194 = vmatpush1.bf16.msra.mxu0 %v1993
  %2195 = vmatprep.subr.bf16.mxu0 0
  %2196 = vmatpush2.bf16.msra.mxu0 0
  %2197 = vmatprep.subr.bf16.mxu0 0
  %2198 = vmatpush2.bf16.msra.mxu0 0
  %2199 = vmatprep.subr.bf16.mxu0 0
  %2200 = vmatpush2.bf16.msra.mxu0 0
  %2201 = vmatprep.subr.bf16.mxu0 0
  %2202 = vmatpush2.bf16.msra.mxu0 0
  %2203 = vmatprep.subr.bf16.mxu0 0
  %2204 = vmatpush2.bf16.msra.mxu0 0
  %2205 = vmatprep.subr.bf16.mxu0 0
  %2206 = vmatpush2.bf16.msra.mxu0 0
  %2207 = vmatprep.subr.bf16.mxu0 0
  %2208 = vmatpush2.bf16.msra.mxu0 0
  %2209 = vmatprep.subr.bf16.mxu0 0
  %2210 = vmatpush2.bf16.msra.mxu0 0
  %2211 = vmatprep.mubr.bf16.mxu0 0
  %2212 = vmatmul.mubr.bf16.gmra.mxu0 %v2136
  %v2213 = vpop.f32.mrf.mxu0
  %v2214 = vadd.f32 %v1696, %v2213
  %v2215 = vpop.f32.mrf.mxu0
  %v2216 = vadd.f32 %v1700, %v2215
  %v2217 = vpop.f32.mrf.mxu0
  %v2218 = vpop.f32.mrf.mxu0
  %2219 = vdwg.mxu0
  %2220 = vmatprep.subr.bf16.mxu0 0
  %2221 = vmatpush1.bf16.msra.mxu0 0
  %2222 = vmatprep.subr.bf16.mxu0 0
  %2223 = vmatpush1.bf16.msra.mxu0 0
  %2224 = vmatprep.subr.bf16.mxu0 0
  %2225 = vmatpush1.bf16.msra.mxu0 0
  %2226 = vmatprep.subr.bf16.mxu0 0
  %2227 = vmatpush1.bf16.msra.mxu0 0
  %2228 = vmatprep.subr.bf16.mxu0 %v2050
  %2229 = vmatpush1.bf16.msra.mxu0 %v2049
  %2230 = vmatprep.subr.bf16.mxu0 %v2032
  %2231 = vmatpush1.bf16.msra.mxu0 %v2031
  %2232 = vmatprep.subr.bf16.mxu0 %v2014
  %2233 = vmatpush1.bf16.msra.mxu0 %v2013
  %2234 = vmatprep.subr.bf16.mxu0 %v1996
  %2235 = vmatpush1.bf16.msra.mxu0 %v1995
  %2236 = vmatprep.subr.bf16.mxu0 0
  %2237 = vmatpush2.bf16.msra.mxu0 0
  %2238 = vmatprep.subr.bf16.mxu0 0
  %2239 = vmatpush2.bf16.msra.mxu0 0
  %2240 = vmatprep.subr.bf16.mxu0 0
  %2241 = vmatpush2.bf16.msra.mxu0 0
  %2242 = vmatprep.subr.bf16.mxu0 0
  %2243 = vmatpush2.bf16.msra.mxu0 0
  %2244 = vmatprep.subr.bf16.mxu0 0
  %2245 = vmatpush2.bf16.msra.mxu0 0
  %2246 = vmatprep.subr.bf16.mxu0 0
  %2247 = vmatpush2.bf16.msra.mxu0 0
  %2248 = vmatprep.subr.bf16.mxu0 0
  %2249 = vmatpush2.bf16.msra.mxu0 0
  %2250 = vmatprep.subr.bf16.mxu0 0
  %2251 = vmatpush2.bf16.msra.mxu0 0
  %2252 = vmatprep.mubr.bf16.mxu0 0
  %2253 = vmatmul.mubr.bf16.gmra.mxu0 %v2136
  %v2254 = vpop.f32.mrf.mxu0
  %v2255 = vadd.f32 %v1704, %v2254
  %v2256 = vpop.f32.mrf.mxu0
  %v2257 = vadd.f32 %v1708, %v2256
  %v2258 = vpop.f32.mrf.mxu0
  %v2259 = vpop.f32.mrf.mxu0
  %2260 = vdwg.mxu0
  %2261 = vmatprep.subr.bf16.mxu0 0
  %2262 = vmatpush1.bf16.msra.mxu0 0
  %2263 = vmatprep.subr.bf16.mxu0 0
  %2264 = vmatpush1.bf16.msra.mxu0 0
  %2265 = vmatprep.subr.bf16.mxu0 0
  %2266 = vmatpush1.bf16.msra.mxu0 0
  %2267 = vmatprep.subr.bf16.mxu0 0
  %2268 = vmatpush1.bf16.msra.mxu0 0
  %2269 = vmatprep.subr.bf16.mxu0 %v2052
  %2270 = vmatpush1.bf16.msra.mxu0 %v2051
  %2271 = vmatprep.subr.bf16.mxu0 %v2034
  %2272 = vmatpush1.bf16.msra.mxu0 %v2033
  %2273 = vmatprep.subr.bf16.mxu0 %v2016
  %2274 = vmatpush1.bf16.msra.mxu0 %v2015
  %2275 = vmatprep.subr.bf16.mxu0 %v1998
  %2276 = vmatpush1.bf16.msra.mxu0 %v1997
  %2277 = vmatprep.subr.bf16.mxu0 0
  %2278 = vmatpush2.bf16.msra.mxu0 0
  %2279 = vmatprep.subr.bf16.mxu0 0
  %2280 = vmatpush2.bf16.msra.mxu0 0
  %2281 = vmatprep.subr.bf16.mxu0 0
  %2282 = vmatpush2.bf16.msra.mxu0 0
  %2283 = vmatprep.subr.bf16.mxu0 0
  %2284 = vmatpush2.bf16.msra.mxu0 0
  %2285 = vmatprep.subr.bf16.mxu0 0
  %2286 = vmatpush2.bf16.msra.mxu0 0
  %2287 = vmatprep.subr.bf16.mxu0 0
  %2288 = vmatpush2.bf16.msra.mxu0 0
  %2289 = vmatprep.subr.bf16.mxu0 0
  %2290 = vmatpush2.bf16.msra.mxu0 0
  %2291 = vmatprep.subr.bf16.mxu0 0
  %2292 = vmatpush2.bf16.msra.mxu0 0
  %2293 = vmatprep.mubr.bf16.mxu0 0
  %2294 = vmatmul.mubr.bf16.gmra.mxu0 %v2136
  %v2295 = vpop.f32.mrf.mxu0
  %v2296 = vadd.f32 %v1712, %v2295
  %v2297 = vpop.f32.mrf.mxu0
  %v2298 = vadd.f32 %v1716, %v2297
  %v2299 = vpop.f32.mrf.mxu0
  %v2300 = vpop.f32.mrf.mxu0
  %2301 = vdwg.mxu0
  %2302 = vmatprep.subr.bf16.mxu0 0
  %2303 = vmatpush1.bf16.msra.mxu0 0
  %2304 = vmatprep.subr.bf16.mxu0 0
  %2305 = vmatpush1.bf16.msra.mxu0 0
  %2306 = vmatprep.subr.bf16.mxu0 0
  %2307 = vmatpush1.bf16.msra.mxu0 0
  %2308 = vmatprep.subr.bf16.mxu0 0
  %2309 = vmatpush1.bf16.msra.mxu0 0
  %2310 = vmatprep.subr.bf16.mxu0 %v2054
  %2311 = vmatpush1.bf16.msra.mxu0 %v2053
  %2312 = vmatprep.subr.bf16.mxu0 %v2036
  %2313 = vmatpush1.bf16.msra.mxu0 %v2035
  %2314 = vmatprep.subr.bf16.mxu0 %v2018
  %2315 = vmatpush1.bf16.msra.mxu0 %v2017
  %2316 = vmatprep.subr.bf16.mxu0 %v2000
  %2317 = vmatpush1.bf16.msra.mxu0 %v1999
  %2318 = vmatprep.subr.bf16.mxu0 0
  %2319 = vmatpush2.bf16.msra.mxu0 0
  %2320 = vmatprep.subr.bf16.mxu0 0
  %2321 = vmatpush2.bf16.msra.mxu0 0
  %2322 = vmatprep.subr.bf16.mxu0 0
  %2323 = vmatpush2.bf16.msra.mxu0 0
  %2324 = vmatprep.subr.bf16.mxu0 0
  %2325 = vmatpush2.bf16.msra.mxu0 0
  %2326 = vmatprep.subr.bf16.mxu0 0
  %2327 = vmatpush2.bf16.msra.mxu0 0
  %2328 = vmatprep.subr.bf16.mxu0 0
  %2329 = vmatpush2.bf16.msra.mxu0 0
  %2330 = vmatprep.subr.bf16.mxu0 0
  %2331 = vmatpush2.bf16.msra.mxu0 0
  %2332 = vmatprep.subr.bf16.mxu0 0
  %2333 = vmatpush2.bf16.msra.mxu0 0
  %2334 = vmatprep.mubr.bf16.mxu0 0
  %2335 = vmatmul.mubr.bf16.gmra.mxu0 %v2136
  %v2336 = vpop.f32.mrf.mxu0
  %v2337 = vadd.f32 %v1720, %v2336
  %v2338 = vpop.f32.mrf.mxu0
  %v2339 = vadd.f32 %v1724, %v2338
  %v2340 = vpop.f32.mrf.mxu0
  %v2341 = vpop.f32.mrf.mxu0
  %2342 = vdwg.mxu0
  %2343 = vmatprep.subr.bf16.mxu0 0
  %2344 = vmatpush1.bf16.msra.mxu0 0
  %2345 = vmatprep.subr.bf16.mxu0 0
  %2346 = vmatpush1.bf16.msra.mxu0 0
  %2347 = vmatprep.subr.bf16.mxu0 0
  %2348 = vmatpush1.bf16.msra.mxu0 0
  %2349 = vmatprep.subr.bf16.mxu0 0
  %2350 = vmatpush1.bf16.msra.mxu0 0
  %2351 = vmatprep.subr.bf16.mxu0 %v2056
  %2352 = vmatpush1.bf16.msra.mxu0 %v2055
  %2353 = vmatprep.subr.bf16.mxu0 %v2038
  %2354 = vmatpush1.bf16.msra.mxu0 %v2037
  %2355 = vmatprep.subr.bf16.mxu0 %v2020
  %2356 = vmatpush1.bf16.msra.mxu0 %v2019
  %2357 = vmatprep.subr.bf16.mxu0 %v2002
  %2358 = vmatpush1.bf16.msra.mxu0 %v2001
  %2359 = vmatprep.subr.bf16.mxu0 0
  %2360 = vmatpush2.bf16.msra.mxu0 0
  %2361 = vmatprep.subr.bf16.mxu0 0
  %2362 = vmatpush2.bf16.msra.mxu0 0
  %2363 = vmatprep.subr.bf16.mxu0 0
  %2364 = vmatpush2.bf16.msra.mxu0 0
  %2365 = vmatprep.subr.bf16.mxu0 0
  %2366 = vmatpush2.bf16.msra.mxu0 0
  %2367 = vmatprep.subr.bf16.mxu0 0
  %2368 = vmatpush2.bf16.msra.mxu0 0
  %2369 = vmatprep.subr.bf16.mxu0 0
  %2370 = vmatpush2.bf16.msra.mxu0 0
  %2371 = vmatprep.subr.bf16.mxu0 0
  %2372 = vmatpush2.bf16.msra.mxu0 0
  %2373 = vmatprep.subr.bf16.mxu0 0
  %2374 = vmatpush2.bf16.msra.mxu0 0
  %2375 = vmatprep.mubr.bf16.mxu0 0
  %2376 = vmatmul.mubr.bf16.gmra.mxu0 %v2136
  %v2377 = vpop.f32.mrf.mxu0
  %v2378 = vadd.f32 %v1728, %v2377
  %v2379 = vpop.f32.mrf.mxu0
  %v2380 = vadd.f32 %v1732, %v2379
  %v2381 = vpop.f32.mrf.mxu0
  %v2382 = vpop.f32.mrf.mxu0
  %2383 = vdwg.mxu0
  %2384 = vmatprep.subr.bf16.mxu0 0
  %2385 = vmatpush1.bf16.msra.mxu0 0
  %2386 = vmatprep.subr.bf16.mxu0 0
  %2387 = vmatpush1.bf16.msra.mxu0 0
  %2388 = vmatprep.subr.bf16.mxu0 0
  %2389 = vmatpush1.bf16.msra.mxu0 0
  %2390 = vmatprep.subr.bf16.mxu0 0
  %2391 = vmatpush1.bf16.msra.mxu0 0
  %2392 = vmatprep.subr.bf16.mxu0 %v2058
  %2393 = vmatpush1.bf16.msra.mxu0 %v2057
  %2394 = vmatprep.subr.bf16.mxu0 %v2040
  %2395 = vmatpush1.bf16.msra.mxu0 %v2039
  %2396 = vmatprep.subr.bf16.mxu0 %v2022
  %2397 = vmatpush1.bf16.msra.mxu0 %v2021
  %2398 = vmatprep.subr.bf16.mxu0 %v2004
  %2399 = vmatpush1.bf16.msra.mxu0 %v2003
  %2400 = vmatprep.subr.bf16.mxu0 0
  %2401 = vmatpush2.bf16.msra.mxu0 0
  %2402 = vmatprep.subr.bf16.mxu0 0
  %2403 = vmatpush2.bf16.msra.mxu0 0
  %2404 = vmatprep.subr.bf16.mxu0 0
  %2405 = vmatpush2.bf16.msra.mxu0 0
  %2406 = vmatprep.subr.bf16.mxu0 0
  %2407 = vmatpush2.bf16.msra.mxu0 0
  %2408 = vmatprep.subr.bf16.mxu0 0
  %2409 = vmatpush2.bf16.msra.mxu0 0
  %2410 = vmatprep.subr.bf16.mxu0 0
  %2411 = vmatpush2.bf16.msra.mxu0 0
  %2412 = vmatprep.subr.bf16.mxu0 0
  %2413 = vmatpush2.bf16.msra.mxu0 0
  %2414 = vmatprep.subr.bf16.mxu0 0
  %2415 = vmatpush2.bf16.msra.mxu0 0
  %2416 = vmatprep.mubr.bf16.mxu0 0
  %2417 = vmatmul.mubr.bf16.gmra.mxu0 %v2136
  %v2418 = vpop.f32.mrf.mxu0
  %v2419 = vadd.f32 %v1736, %v2418
  %v2420 = vpop.f32.mrf.mxu0
  %v2421 = vadd.f32 %v1740, %v2420
  %v2422 = vpop.f32.mrf.mxu0
  %v2423 = vpop.f32.mrf.mxu0
  %2424 = vdwg.mxu0
  %2425 = vmatprep.subr.bf16.mxu0 0
  %2426 = vmatpush1.bf16.msra.mxu0 0
  %2427 = vmatprep.subr.bf16.mxu0 0
  %2428 = vmatpush1.bf16.msra.mxu0 0
  %2429 = vmatprep.subr.bf16.mxu0 0
  %2430 = vmatpush1.bf16.msra.mxu0 0
  %2431 = vmatprep.subr.bf16.mxu0 0
  %2432 = vmatpush1.bf16.msra.mxu0 0
  %2433 = vmatprep.subr.bf16.mxu0 %v2060
  %2434 = vmatpush1.bf16.msra.mxu0 %v2059
  %2435 = vmatprep.subr.bf16.mxu0 %v2042
  %2436 = vmatpush1.bf16.msra.mxu0 %v2041
  %2437 = vmatprep.subr.bf16.mxu0 %v2024
  %2438 = vmatpush1.bf16.msra.mxu0 %v2023
  %2439 = vmatprep.subr.bf16.mxu0 %v2006
  %2440 = vmatpush1.bf16.msra.mxu0 %v2005
  %2441 = vmatprep.subr.bf16.mxu0 0
  %2442 = vmatpush2.bf16.msra.mxu0 0
  %2443 = vmatprep.subr.bf16.mxu0 0
  %2444 = vmatpush2.bf16.msra.mxu0 0
  %2445 = vmatprep.subr.bf16.mxu0 0
  %2446 = vmatpush2.bf16.msra.mxu0 0
  %2447 = vmatprep.subr.bf16.mxu0 0
  %2448 = vmatpush2.bf16.msra.mxu0 0
  %2449 = vmatprep.subr.bf16.mxu0 0
  %2450 = vmatpush2.bf16.msra.mxu0 0
  %2451 = vmatprep.subr.bf16.mxu0 0
  %2452 = vmatpush2.bf16.msra.mxu0 0
  %2453 = vmatprep.subr.bf16.mxu0 0
  %2454 = vmatpush2.bf16.msra.mxu0 0
  %2455 = vmatprep.subr.bf16.mxu0 0
  %2456 = vmatpush2.bf16.msra.mxu0 0
  %2457 = vmatprep.mubr.bf16.mxu0 0
  %2458 = vmatmul.mubr.bf16.gmra.mxu0 %v2136
  %v2459 = vpop.f32.mrf.mxu0
  %v2460 = vadd.f32 %v1744, %v2459
  %v2461 = vpop.f32.mrf.mxu0
  %v2462 = vadd.f32 %v1748, %v2461
  %v2463 = vpop.f32.mrf.mxu0
  %v2464 = vpop.f32.mrf.mxu0
  %2465 = vdwg.mxu0
  %2466 = vmatprep.subr.bf16.mxu0 0
  %2467 = vmatpush1.bf16.msra.mxu0 0
  %2468 = vmatprep.subr.bf16.mxu0 0
  %2469 = vmatpush1.bf16.msra.mxu0 0
  %2470 = vmatprep.subr.bf16.mxu0 0
  %2471 = vmatpush1.bf16.msra.mxu0 0
  %2472 = vmatprep.subr.bf16.mxu0 0
  %2473 = vmatpush1.bf16.msra.mxu0 0
  %2474 = vmatprep.subr.bf16.mxu0 %v2062
  %2475 = vmatpush1.bf16.msra.mxu0 %v2061
  %2476 = vmatprep.subr.bf16.mxu0 %v2044
  %2477 = vmatpush1.bf16.msra.mxu0 %v2043
  %2478 = vmatprep.subr.bf16.mxu0 %v2026
  %2479 = vmatpush1.bf16.msra.mxu0 %v2025
  %2480 = vmatprep.subr.bf16.mxu0 %v2008
  %2481 = vmatpush1.bf16.msra.mxu0 %v2007
  %2482 = vmatprep.subr.bf16.mxu0 0
  %2483 = vmatpush2.bf16.msra.mxu0 0
  %2484 = vmatprep.subr.bf16.mxu0 0
  %2485 = vmatpush2.bf16.msra.mxu0 0
  %2486 = vmatprep.subr.bf16.mxu0 0
  %2487 = vmatpush2.bf16.msra.mxu0 0
  %2488 = vmatprep.subr.bf16.mxu0 0
  %2489 = vmatpush2.bf16.msra.mxu0 0
  %2490 = vmatprep.subr.bf16.mxu0 0
  %2491 = vmatpush2.bf16.msra.mxu0 0
  %2492 = vmatprep.subr.bf16.mxu0 0
  %2493 = vmatpush2.bf16.msra.mxu0 0
  %2494 = vmatprep.subr.bf16.mxu0 0
  %2495 = vmatpush2.bf16.msra.mxu0 0
  %2496 = vmatprep.subr.bf16.mxu0 0
  %2497 = vmatpush2.bf16.msra.mxu0 0
  %2498 = vmatprep.mubr.bf16.mxu0 0
  %2499 = vmatmul.mubr.bf16.gmra.mxu0 %v2136
  %v2500 = vpop.f32.mrf.mxu0
  %v2501 = vadd.f32 %v1752, %v2500
  %v2502 = vpop.f32.mrf.mxu0
  %v2503 = vadd.f32 %v1756, %v2502
  %v2504 = vpop.f32.mrf.mxu0
  %v2505 = vpop.f32.mrf.mxu0
  %2506 = vdwg.mxu0
  %v2507 = vlaneseq
  %v2508 = vand.u32 %v2507, 127
  %v2509 = vadd.s32 %v2508, 128
  %v2510 = vadd.s32 %v2508, 256
  %v2511 = vadd.s32 %v2508, 384
  %v2512 = vadd.s32 %v2508, 512
  %v2513 = vadd.s32 %v2508, 640
  %v2514 = vadd.s32 %v2508, 768
  %v2515 = vadd.s32 %v2508, 896
  %v2516 = vadd.s32 %v2508, 1024
  %v2517 = vadd.s32 %v2508, 1152
  %v2518 = vadd.s32 %v2508, 1280
  %v2519 = vadd.s32 %v2508, 1408
  %v2520 = vadd.s32 %v2508, 1536
  %v2521 = vadd.s32 %v2508, 1664
  %v2522 = vadd.s32 %v2508, 1792
  %v2523 = vadd.s32 %v2508, 1920
  %v2524 = vadd.s32 %v2508, 2048
  %v2525 = vadd.s32 %v2508, 2176
  %vm2526 = vcmp.lt.s32.totalorder %v2508, 256
  %vm2527 = vcmp.lt.s32.totalorder %v2509, 256
  %vm2528 = vcmp.lt.s32.totalorder %v2510, 256
  %vm2529 = vcmp.lt.s32.totalorder %v2511, 256
  %vm2530 = vcmp.lt.s32.totalorder %v2512, 256
  %vm2531 = vcmp.lt.s32.totalorder %v2513, 256
  %vm2532 = vcmp.lt.s32.totalorder %v2514, 256
  %vm2533 = vcmp.lt.s32.totalorder %v2515, 256
  %vm2534 = vcmp.lt.s32.totalorder %v2516, 256
  %vm2535 = vcmp.lt.s32.totalorder %v2517, 256
  %vm2536 = vcmp.lt.s32.totalorder %v2518, 256
  %vm2537 = vcmp.lt.s32.totalorder %v2519, 256
  %vm2538 = vcmp.lt.s32.totalorder %v2520, 256
  %vm2539 = vcmp.lt.s32.totalorder %v2521, 256
  %vm2540 = vcmp.lt.s32.totalorder %v2522, 256
  %vm2541 = vcmp.lt.s32.totalorder %v2523, 256
  %vm2542 = vcmp.lt.s32.totalorder %v2524, 256
  %vm2543 = vcmp.lt.s32.totalorder %v2525, 256
  %v2544 = vxor.u32 %v2173, 2147483648
  %v2545 = vxor.u32 %v2175, 2147483648
  %v2546 = vxor.u32 %v2214, 2147483648
  %v2547 = vxor.u32 %v2216, 2147483648
  %v2548 = vxor.u32 %v2255, 2147483648
  %v2549 = vxor.u32 %v2257, 2147483648
  %v2550 = vxor.u32 %v2296, 2147483648
  %v2551 = vxor.u32 %v2298, 2147483648
  %v2552 = vxor.u32 %v2337, 2147483648
  %v2553 = vxor.u32 %v2339, 2147483648
  %v2554 = vxor.u32 %v2378, 2147483648
  %v2555 = vxor.u32 %v2380, 2147483648
  %v2556 = vxor.u32 %v2419, 2147483648
  %v2557 = vxor.u32 %v2421, 2147483648
  %v2558 = vxor.u32 %v2460, 2147483648
  %v2559 = vxor.u32 %v2462, 2147483648
  %v2560 = vxor.u32 %v2501, 2147483648
  %v2561 = vxor.u32 %v2503, 2147483648
  %v2562 = vmul.f32 %v2544, 1.442695
  %v2563 = vpow.pop %v2562
  %v2564 = vmul.f32 %v2545, 1.442695
  %v2565 = vpow.pop %v2564
  %v2566 = vmul.f32 %v2546, 1.442695
  %v2567 = vpow.pop %v2566
  %v2568 = vmul.f32 %v2547, 1.442695
  %v2569 = vpow.pop %v2568
  %v2570 = vmul.f32 %v2548, 1.442695
  %v2571 = vpow.pop %v2570
  %v2572 = vmul.f32 %v2549, 1.442695
  %v2573 = vpow.pop %v2572
  %v2574 = vmul.f32 %v2550, 1.442695
  %v2575 = vpow.pop %v2574
  %v2576 = vmul.f32 %v2551, 1.442695
  %v2577 = vpow.pop %v2576
  %v2578 = vmul.f32 %v2552, 1.442695
  %v2579 = vpow.pop %v2578
  %v2580 = vmul.f32 %v2553, 1.442695
  %v2581 = vpow.pop %v2580
  %v2582 = vmul.f32 %v2554, 1.442695
  %v2583 = vpow.pop %v2582
  %v2584 = vmul.f32 %v2555, 1.442695
  %v2585 = vpow.pop %v2584
  %v2586 = vmul.f32 %v2556, 1.442695
  %v2587 = vpow.pop %v2586
  %v2588 = vmul.f32 %v2557, 1.442695
  %v2589 = vpow.pop %v2588
  %v2590 = vmul.f32 %v2558, 1.442695
  %v2591 = vpow.pop %v2590
  %v2592 = vmul.f32 %v2559, 1.442695
  %v2593 = vpow.pop %v2592
  %v2594 = vmul.f32 %v2560, 1.442695
  %v2595 = vpow.pop %v2594
  %v2596 = vmul.f32 %v2561, 1.442695
  %v2597 = vpow.pop %v2596
  %v2598 = vadd.f32 %v2563, 1.0
  %v2599 = vadd.f32 %v2565, 1.0
  %v2600 = vadd.f32 %v2567, 1.0
  %v2601 = vadd.f32 %v2569, 1.0
  %v2602 = vadd.f32 %v2571, 1.0
  %v2603 = vadd.f32 %v2573, 1.0
  %v2604 = vadd.f32 %v2575, 1.0
  %v2605 = vadd.f32 %v2577, 1.0
  %v2606 = vadd.f32 %v2579, 1.0
  %v2607 = vadd.f32 %v2581, 1.0
  %v2608 = vadd.f32 %v2583, 1.0
  %v2609 = vadd.f32 %v2585, 1.0
  %v2610 = vadd.f32 %v2587, 1.0
  %v2611 = vadd.f32 %v2589, 1.0
  %v2612 = vadd.f32 %v2591, 1.0
  %v2613 = vadd.f32 %v2593, 1.0
  %v2614 = vadd.f32 %v2595, 1.0
  %v2615 = vadd.f32 %v2597, 1.0
  %v2616 = vrcp.pop %v2598
  %v2617 = vmul.f32 1.0, %v2616
  %v2618 = vrcp.pop %v2599
  %v2619 = vmul.f32 1.0, %v2618
  %v2620 = vrcp.pop %v2600
  %v2621 = vmul.f32 1.0, %v2620
  %v2622 = vrcp.pop %v2601
  %v2623 = vmul.f32 1.0, %v2622
  %v2624 = vrcp.pop %v2602
  %v2625 = vmul.f32 1.0, %v2624
  %v2626 = vrcp.pop %v2603
  %v2627 = vmul.f32 1.0, %v2626
  %v2628 = vrcp.pop %v2604
  %v2629 = vmul.f32 1.0, %v2628
  %v2630 = vrcp.pop %v2605
  %v2631 = vmul.f32 1.0, %v2630
  %v2632 = vrcp.pop %v2606
  %v2633 = vmul.f32 1.0, %v2632
  %v2634 = vrcp.pop %v2607
  %v2635 = vmul.f32 1.0, %v2634
  %v2636 = vrcp.pop %v2608
  %v2637 = vmul.f32 1.0, %v2636
  %v2638 = vrcp.pop %v2609
  %v2639 = vmul.f32 1.0, %v2638
  %v2640 = vrcp.pop %v2610
  %v2641 = vmul.f32 1.0, %v2640
  %v2642 = vrcp.pop %v2611
  %v2643 = vmul.f32 1.0, %v2642
  %v2644 = vrcp.pop %v2612
  %v2645 = vmul.f32 1.0, %v2644
  %v2646 = vrcp.pop %v2613
  %v2647 = vmul.f32 1.0, %v2646
  %v2648 = vrcp.pop %v2614
  %v2649 = vmul.f32 1.0, %v2648
  %v2650 = vrcp.pop %v2615
  %v2651 = vmul.f32 1.0, %v2650
  %v2652 = vsel %vm2526, %v2173, %v2617
  %v2653 = vsel %vm2527, %v2175, %v2619
  %v2654 = vsel %vm2528, %v2214, %v2621
  %v2655 = vsel %vm2529, %v2216, %v2623
  %v2656 = vsel %vm2530, %v2255, %v2625
  %v2657 = vsel %vm2531, %v2257, %v2627
  %v2658 = vsel %vm2532, %v2296, %v2629
  %v2659 = vsel %vm2533, %v2298, %v2631
  %v2660 = vsel %vm2534, %v2337, %v2633
  %v2661 = vsel %vm2535, %v2339, %v2635
  %v2662 = vsel %vm2536, %v2378, %v2637
  %v2663 = vsel %vm2537, %v2380, %v2639
  %v2664 = vsel %vm2538, %v2419, %v2641
  %v2665 = vsel %vm2539, %v2421, %v2643
  %v2666 = vsel %vm2540, %v2460, %v2645
  %v2667 = vsel %vm2541, %v2462, %v2647
  %v2668 = vsel %vm2542, %v2501, %v2649
  %v2669 = vsel %vm2543, %v2503, %v2651
  %v2688 = vcombine.low %v2652, %v2653
  %v2689 = vcombine.low %v2654, %v2655
  %v2691 = vunpack.c.l.s4 1983009808
  %v2692 = vunpack.c.0.s8 %v2691
  %v2693 = vlaneseq
  %v2694 = vshrl.u32 %v2693, 7
  %v2695 = vsub.s32 %v2692, %v2694
  %v2696 = vrot.slane %v2688, %v2695
  %v2698 = vunpack.c.l.s4 1983009808
  %v2699 = vunpack.c.0.s8 %v2698
  %v2700 = vlaneseq
  %v2701 = vshrl.u32 %v2700, 7
  %v2702 = vsub.s32 %v2699, %v2701
  %v2703 = vrot.slane %v2689, %v2702
  %v2704 = vcombine.low %v2696, %v2703
  %v2705 = vcombine.low %v2656, %v2657
  %v2706 = vcombine.low %v2658, %v2659
  %v2708 = vunpack.c.l.s4 1983009808
  %v2709 = vunpack.c.0.s8 %v2708
  %v2710 = vlaneseq
  %v2711 = vshrl.u32 %v2710, 7
  %v2712 = vsub.s32 %v2709, %v2711
  %v2713 = vrot.slane %v2705, %v2712
  %v2715 = vunpack.c.l.s4 1983009808
  %v2716 = vunpack.c.0.s8 %v2715
  %v2717 = vlaneseq
  %v2718 = vshrl.u32 %v2717, 7
  %v2719 = vsub.s32 %v2716, %v2718
  %v2720 = vrot.slane %v2706, %v2719
  %v2721 = vcombine.low %v2713, %v2720
  %v2722 = vcombine.low %v2660, %v2661
  %v2723 = vcombine.low %v2662, %v2663
  %v2725 = vunpack.c.l.s4 1983009808
  %v2726 = vunpack.c.0.s8 %v2725
  %v2727 = vlaneseq
  %v2728 = vshrl.u32 %v2727, 7
  %v2729 = vsub.s32 %v2726, %v2728
  %v2730 = vrot.slane %v2722, %v2729
  %v2732 = vunpack.c.l.s4 1983009808
  %v2733 = vunpack.c.0.s8 %v2732
  %v2734 = vlaneseq
  %v2735 = vshrl.u32 %v2734, 7
  %v2736 = vsub.s32 %v2733, %v2735
  %v2737 = vrot.slane %v2723, %v2736
  %v2738 = vcombine.low %v2730, %v2737
  %v2739 = vcombine.low %v2664, %v2665
  %v2740 = vcombine.low %v2666, %v2667
  %v2742 = vunpack.c.l.s4 1983009808
  %v2743 = vunpack.c.0.s8 %v2742
  %v2744 = vlaneseq
  %v2745 = vshrl.u32 %v2744, 7
  %v2746 = vsub.s32 %v2743, %v2745
  %v2747 = vrot.slane %v2739, %v2746
  %v2749 = vunpack.c.l.s4 1983009808
  %v2750 = vunpack.c.0.s8 %v2749
  %v2751 = vlaneseq
  %v2752 = vshrl.u32 %v2751, 7
  %v2753 = vsub.s32 %v2750, %v2752
  %v2754 = vrot.slane %v2740, %v2753
  %v2755 = vcombine.low %v2747, %v2754
  %v2756 = vcombine.low %v2668, %v2669
  %v2758 = vunpack.c.l.s4 1983009808
  %v2759 = vunpack.c.0.s8 %v2758
  %v2760 = vlaneseq
  %v2761 = vshrl.u32 %v2760, 7
  %v2762 = vsub.s32 %v2759, %v2761
  %v2763 = vrot.slane %v2756, %v2762
  %2769 = vst [vmem:[%s12] sm:$0xff] %v2704
  %2770 = vst [vmem:[%s12 + $0x8] sm:$0xff] %v2721
  %2771 = vst [vmem:[%s12 + $0x10] sm:$0xff] %v2738
  %2772 = vst [vmem:[%s12 + $0x18] sm:$0xff] %v2755
  %2773 = vst [vmem:[%s12 + $0x20] sm:$0xf] %v2763
  // Predicated region
  $region46: #{mcvae_classifier_retina_forward.1} parent=0 // pred_check
    _
  $region47: #{mcvae_classifier_retina_forward.1} parent=0 // pred_check_branch
    %2775 = sbr.rel (0) target = $region49
  $region48: #{mcvae_classifier_retina_forward.1} parent=0 // pred_region
    _
  $region49: #{mcvae_classifier_retina_forward.1} parent=0 // pred_fallthru
    _
  // Predicated region
  $region50: #{mcvae_classifier_retina_forward.1} parent=0 // pred_check
    _
  $region51: #{mcvae_classifier_retina_forward.1} parent=0 // pred_check_branch
    %2777 = sbr.rel (0) target = $region53
  $region52: #{mcvae_classifier_retina_forward.1} parent=0 // pred_region
    _
  $region53: #{mcvae_classifier_retina_forward.1} parent=0 // pred_fallthru
    _
  // Predicated region
  $region54: #{mcvae_classifier_retina_forward.1} parent=0 // pred_check
    _
  $region55: #{mcvae_classifier_retina_forward.1} parent=0 // pred_check_branch
    %2779 = sbr.rel (0) target = $region57
  $region56: #{mcvae_classifier_retina_forward.1} parent=0 // pred_region
    _
  $region57: #{mcvae_classifier_retina_forward.1} parent=0 // pred_fallthru
    _
  // Predicated region
  $region58: #{mcvae_classifier_retina_forward.1} parent=0 // pred_check
    _
  $region59: #{mcvae_classifier_retina_forward.1} parent=0 // pred_check_branch
    %2781 = sbr.rel (0) target = $region61
  $region60: #{mcvae_classifier_retina_forward.1} parent=0 // pred_region
    _
  $region61: #{mcvae_classifier_retina_forward.1} parent=0 // pred_fallthru
    _

</llo_original>
